<compile_context>
chip_gen: v7x
topology: tpu7x:2x2x1
jax: 0.10.0
libtpu: 0.0.40
codegen_flags: <defaults>
</compile_context>

<pallas_src>
import jax
import jax.numpy as jnp
from jax import lax
from jax.experimental import pallas as pl


# --------------------------------------------------------------------------- #
# Fused kernel: stacked 2-layer tanh RNN recurrence + Linear->ReLU->Linear head
# --------------------------------------------------------------------------- #
def fused_rnn_mlp_kernel(x_ref,              # (S, B, I)   full sequence in VMEM
                         w0_ref, b0_ref,     # (I+H, H), (1, H)   layer 0 fused
                         w1_ref, b1_ref,     # (2H, H),  (1, H)   layer 1 fused
                         wm1_ref, bm1_ref,   # (H, M), (1, M)     MLP linear 1
                         wm2_ref, bm2_ref,   # (M, C), (1, C)     MLP linear 2
                         out_ref):           # (B, C)             logits
    S, B, _ = x_ref.shape
    H = w0_ref.shape[1]

    # Hoist weight loads and bias broadcasts out of the time loop
    # (JAX does not CSE broadcast_in_dim inside loops).
    w0 = w0_ref[...]
    w1 = w1_ref[...]
    b0 = jnp.broadcast_to(b0_ref[...], (B, H))
    b1 = jnp.broadcast_to(b1_ref[...], (B, H))

    def step(t, carry):
        h0, h1 = carry
        x_t = x_ref[t]                                            # (B, I)
        # Layer 0: h0 = tanh([x_t, h0] @ [Wih0; Whh0] + (bih0 + bhh0))
        h0 = jnp.tanh(
            jnp.dot(jnp.concatenate([x_t, h0], axis=1), w0,
                    preferred_element_type=jnp.float32) + b0)
        # TODO(synk): inter-layer dropout omitted (inference / eval => identity)
        # Layer 1: h1 = tanh([h0, h1] @ [Wih1; Whh1] + (bih1 + bhh1))
        h1 = jnp.tanh(
            jnp.dot(jnp.concatenate([h0, h1], axis=1), w1,
                    preferred_element_type=jnp.float32) + b1)
        return h0, h1

    h_init = (jnp.zeros((B, H), jnp.float32), jnp.zeros((B, H), jnp.float32))
    _, h1 = lax.fori_loop(0, S, step, h_init, unroll=True)

    # Fused MLP classifier head on the in-VMEM final hidden state.
    z = jnp.dot(h1, wm1_ref[...], preferred_element_type=jnp.float32) + bm1_ref[...]
    z = jnp.maximum(z, 0.0)
    out_ref[...] = (jnp.dot(z, wm2_ref[...], preferred_element_type=jnp.float32)
                    + bm2_ref[...]).astype(out_ref.dtype)


def _forward_impl(x, fp):
    B = x.shape[1]
    C = fp["wm2"].shape[1]
    # Whole problem fits VMEM: no grid, every operand is a full-array VMEM block.
    return pl.pallas_call(
        fused_rnn_mlp_kernel,
        out_shape=jax.ShapeDtypeStruct((B, C), jnp.float32),
    )(x, fp["w0"], fp["b0"], fp["w1"], fp["b1"],
      fp["wm1"], fp["bm1"], fp["wm2"], fp["bm2"])


rnn_model_forward = jax.jit(_forward_impl)


def fuse_params(p):
    """Host-side prep: concatenate [Wih; Whh] per layer and fold bias pairs."""
    return {
        "w0": jnp.concatenate([p["wih0"], p["whh0"]], axis=0),   # (I+H, H)
        "b0": p["bih0"] + p["bhh0"],                             # (1, H)
        "w1": jnp.concatenate([p["wih1"], p["whh1"]], axis=0),   # (2H, H)
        "b1": p["bih1"] + p["bhh1"],                             # (1, H)
        "wm1": p["w1"], "bm1": p["b1"],                          # (H, M), (1, M)
        "wm2": p["w2"], "bm2": p["b2"],                          # (M, C), (1, C)
    }


# Pure-JAX reference (mirrors PyTorch nn.RNN eval semantics) for verification.
def reference_forward(x, p):
    S, B, _ = x.shape
    H = p["wih0"].shape[1]
    h0 = jnp.zeros((B, H), jnp.float32)
    h1 = jnp.zeros((B, H), jnp.float32)
    for t in range(S):
        h0 = jnp.tanh(x[t] @ p["wih0"] + p["bih0"] + h0 @ p["whh0"] + p["bhh0"])
        h1 = jnp.tanh(h0 @ p["wih1"] + p["bih1"] + h1 @ p["whh1"] + p["bhh1"])
    z = jnp.maximum(h1 @ p["w1"] + p["b1"], 0.0)
    return z @ p["w2"] + p["b2"]


if __name__ == "__main__":
    # Small shapes consistent with the module signature.
    SEQ, BATCH = 8, 8
    INPUT_SIZE, HIDDEN_SIZE, NUM_LAYERS = 16, 32, 2
    MLP_HIDDEN, NUM_CLASSES = 32, 4
    assert NUM_LAYERS == 2  # kernel is written for the 2-layer stacked case

    key = jax.random.PRNGKey(0)
    ks = jax.random.split(key, 16)
    bound_rnn = 1.0 / jnp.sqrt(HIDDEN_SIZE)

    def u(k, shape, bound):
        return jax.random.uniform(k, shape, jnp.float32, -bound, bound)

    params = {
        # RNN layer 0 (weights stored pre-transposed: in_features x out_features)
        "wih0": u(ks[0], (INPUT_SIZE, HIDDEN_SIZE), bound_rnn),
        "whh0": u(ks[1], (HIDDEN_SIZE, HIDDEN_SIZE), bound_rnn),
        "bih0": u(ks[2], (1, HIDDEN_SIZE), bound_rnn),
        "bhh0": u(ks[3], (1, HIDDEN_SIZE), bound_rnn),
        # RNN layer 1
        "wih1": u(ks[4], (HIDDEN_SIZE, HIDDEN_SIZE), bound_rnn),
        "whh1": u(ks[5], (HIDDEN_SIZE, HIDDEN_SIZE), bound_rnn),
        "bih1": u(ks[6], (1, HIDDEN_SIZE), bound_rnn),
        "bhh1": u(ks[7], (1, HIDDEN_SIZE), bound_rnn),
        # Classifier MLP: Linear(H, M) -> ReLU -> Linear(M, C)
        "w1": u(ks[8], (HIDDEN_SIZE, MLP_HIDDEN), 1.0 / jnp.sqrt(HIDDEN_SIZE)),
        "b1": u(ks[9], (1, MLP_HIDDEN), 1.0 / jnp.sqrt(HIDDEN_SIZE)),
        "w2": u(ks[10], (MLP_HIDDEN, NUM_CLASSES), 1.0 / jnp.sqrt(MLP_HIDDEN)),
        "b2": u(ks[11], (1, NUM_CLASSES), 1.0 / jnp.sqrt(MLP_HIDDEN)),
    }

    # Input: time-major (seq_len, batch, input_size), like PyTorch nn.RNN default.
    x = jax.random.normal(ks[12], (SEQ, BATCH, INPUT_SIZE), jnp.float32)

    fused = fuse_params(params)
    logits = rnn_model_forward(x, fused)
    jax.block_until_ready(logits)

    ref = reference_forward(x, params)
    assert logits.shape == (BATCH, NUM_CLASSES)
    assert jnp.allclose(logits, ref, atol=1e-5, rtol=1e-5), "mismatch vs reference"

    print("KERNEL_OK")
</pallas_src>

<mosaic_0001>
module attributes {stable_mosaic.version = 11 : i64} {
  func.func @fused_rnn_mlp_kernel(%arg0: memref<8x8x16xf32, #tpu.memory_space<vmem>>, %arg1: memref<48x32xf32, #tpu.memory_space<vmem>>, %arg2: memref<1x32xf32, #tpu.memory_space<vmem>>, %arg3: memref<64x32xf32, #tpu.memory_space<vmem>>, %arg4: memref<1x32xf32, #tpu.memory_space<vmem>>, %arg5: memref<32x32xf32, #tpu.memory_space<vmem>>, %arg6: memref<1x32xf32, #tpu.memory_space<vmem>>, %arg7: memref<32x4xf32, #tpu.memory_space<vmem>>, %arg8: memref<1x4xf32, #tpu.memory_space<vmem>>, %arg9: memref<8x4xf32, #tpu.memory_space<vmem>>) attributes {dimension_semantics = [], scalar_prefetch = 0 : i64, scratch_operands = 0 : i64, tpu.core_type = #tpu.core_type<tc>} {
    %c0 = arith.constant 0 : index
    %c0_0 = arith.constant 0 : index
    %0 = vector.load %arg1[%c0, %c0_0] : memref<48x32xf32, #tpu.memory_space<vmem>>, vector<48x32xf32>
    %c0_1 = arith.constant 0 : index
    %c0_2 = arith.constant 0 : index
    %1 = vector.load %arg3[%c0_1, %c0_2] : memref<64x32xf32, #tpu.memory_space<vmem>>, vector<64x32xf32>
    %c0_3 = arith.constant 0 : index
    %c0_4 = arith.constant 0 : index
    %2 = vector.load %arg2[%c0_3, %c0_4] : memref<1x32xf32, #tpu.memory_space<vmem>>, vector<1x32xf32>
    %3 = vector.shape_cast %2 : vector<1x32xf32> to vector<1x32xf32>
    %4 = vector.broadcast %3 : vector<1x32xf32> to vector<8x32xf32>
    %c0_5 = arith.constant 0 : index
    %c0_6 = arith.constant 0 : index
    %5 = vector.load %arg4[%c0_5, %c0_6] : memref<1x32xf32, #tpu.memory_space<vmem>>, vector<1x32xf32>
    %6 = vector.shape_cast %5 : vector<1x32xf32> to vector<1x32xf32>
    %7 = vector.broadcast %6 : vector<1x32xf32> to vector<8x32xf32>
    %cst = arith.constant 0.000000e+00 : f32
    %8 = vector.broadcast %cst : f32 to vector<8x32xf32>
    %cst_7 = arith.constant 0.000000e+00 : f32
    %9 = vector.broadcast %cst_7 : f32 to vector<8x32xf32>
    %c0_i32 = arith.constant 0 : i32
    %10 = arith.index_cast %c0_i32 : i32 to index
    %c0_8 = arith.constant 0 : index
    %c0_9 = arith.constant 0 : index
    %11 = vector.load %arg0[%10, %c0_8, %c0_9] : memref<8x8x16xf32, #tpu.memory_space<vmem>>, vector<1x8x16xf32>
    %12 = vector.shape_cast %11 : vector<1x8x16xf32> to vector<8x16xf32>
    %13 = tpu.concatenate %12, %8 in 1 : vector<8x16xf32>, vector<8x32xf32> -> vector<8x48xf32>
    %cst_10 = arith.constant dense<0.000000e+00> : vector<8x32xf32>
    %14 = tpu.matmul %13, %0, %cst_10 {dimension_numbers = #tpu.dot_dimension_numbers<[1], [0], [0], [1], [0, 0, 1, 1], [], []>} : vector<8x48xf32>, vector<48x32xf32>, vector<8x32xf32> -> vector<8x32xf32>
    %15 = arith.addf %14, %4 : vector<8x32xf32>
    %16 = math.tanh %15 : vector<8x32xf32>
    %17 = tpu.concatenate %16, %9 in 1 : vector<8x32xf32>, vector<8x32xf32> -> vector<8x64xf32>
    %cst_11 = arith.constant dense<0.000000e+00> : vector<8x32xf32>
    %18 = tpu.matmul %17, %1, %cst_11 {dimension_numbers = #tpu.dot_dimension_numbers<[1], [0], [0], [1], [0, 0, 1, 1], [], []>} : vector<8x64xf32>, vector<64x32xf32>, vector<8x32xf32> -> vector<8x32xf32>
    %19 = arith.addf %18, %7 : vector<8x32xf32>
    %20 = math.tanh %19 : vector<8x32xf32>
    %c1_i32 = arith.constant 1 : i32
    %21 = arith.index_cast %c1_i32 : i32 to index
    %c0_12 = arith.constant 0 : index
    %c0_13 = arith.constant 0 : index
    %22 = vector.load %arg0[%21, %c0_12, %c0_13] : memref<8x8x16xf32, #tpu.memory_space<vmem>>, vector<1x8x16xf32>
    %23 = vector.shape_cast %22 : vector<1x8x16xf32> to vector<8x16xf32>
    %24 = tpu.concatenate %23, %16 in 1 : vector<8x16xf32>, vector<8x32xf32> -> vector<8x48xf32>
    %cst_14 = arith.constant dense<0.000000e+00> : vector<8x32xf32>
    %25 = tpu.matmul %24, %0, %cst_14 {dimension_numbers = #tpu.dot_dimension_numbers<[1], [0], [0], [1], [0, 0, 1, 1], [], []>} : vector<8x48xf32>, vector<48x32xf32>, vector<8x32xf32> -> vector<8x32xf32>
    %26 = arith.addf %25, %4 : vector<8x32xf32>
    %27 = math.tanh %26 : vector<8x32xf32>
    %28 = tpu.concatenate %27, %20 in 1 : vector<8x32xf32>, vector<8x32xf32> -> vector<8x64xf32>
    %cst_15 = arith.constant dense<0.000000e+00> : vector<8x32xf32>
    %29 = tpu.matmul %28, %1, %cst_15 {dimension_numbers = #tpu.dot_dimension_numbers<[1], [0], [0], [1], [0, 0, 1, 1], [], []>} : vector<8x64xf32>, vector<64x32xf32>, vector<8x32xf32> -> vector<8x32xf32>
    %30 = arith.addf %29, %7 : vector<8x32xf32>
    %31 = math.tanh %30 : vector<8x32xf32>
    %c2_i32 = arith.constant 2 : i32
    %32 = arith.index_cast %c2_i32 : i32 to index
    %c0_16 = arith.constant 0 : index
    %c0_17 = arith.constant 0 : index
    %33 = vector.load %arg0[%32, %c0_16, %c0_17] : memref<8x8x16xf32, #tpu.memory_space<vmem>>, vector<1x8x16xf32>
    %34 = vector.shape_cast %33 : vector<1x8x16xf32> to vector<8x16xf32>
    %35 = tpu.concatenate %34, %27 in 1 : vector<8x16xf32>, vector<8x32xf32> -> vector<8x48xf32>
    %cst_18 = arith.constant dense<0.000000e+00> : vector<8x32xf32>
    %36 = tpu.matmul %35, %0, %cst_18 {dimension_numbers = #tpu.dot_dimension_numbers<[1], [0], [0], [1], [0, 0, 1, 1], [], []>} : vector<8x48xf32>, vector<48x32xf32>, vector<8x32xf32> -> vector<8x32xf32>
    %37 = arith.addf %36, %4 : vector<8x32xf32>
    %38 = math.tanh %37 : vector<8x32xf32>
    %39 = tpu.concatenate %38, %31 in 1 : vector<8x32xf32>, vector<8x32xf32> -> vector<8x64xf32>
    %cst_19 = arith.constant dense<0.000000e+00> : vector<8x32xf32>
    %40 = tpu.matmul %39, %1, %cst_19 {dimension_numbers = #tpu.dot_dimension_numbers<[1], [0], [0], [1], [0, 0, 1, 1], [], []>} : vector<8x64xf32>, vector<64x32xf32>, vector<8x32xf32> -> vector<8x32xf32>
    %41 = arith.addf %40, %7 : vector<8x32xf32>
    %42 = math.tanh %41 : vector<8x32xf32>
    %c3_i32 = arith.constant 3 : i32
    %43 = arith.index_cast %c3_i32 : i32 to index
    %c0_20 = arith.constant 0 : index
    %c0_21 = arith.constant 0 : index
    %44 = vector.load %arg0[%43, %c0_20, %c0_21] : memref<8x8x16xf32, #tpu.memory_space<vmem>>, vector<1x8x16xf32>
    %45 = vector.shape_cast %44 : vector<1x8x16xf32> to vector<8x16xf32>
    %46 = tpu.concatenate %45, %38 in 1 : vector<8x16xf32>, vector<8x32xf32> -> vector<8x48xf32>
    %cst_22 = arith.constant dense<0.000000e+00> : vector<8x32xf32>
    %47 = tpu.matmul %46, %0, %cst_22 {dimension_numbers = #tpu.dot_dimension_numbers<[1], [0], [0], [1], [0, 0, 1, 1], [], []>} : vector<8x48xf32>, vector<48x32xf32>, vector<8x32xf32> -> vector<8x32xf32>
    %48 = arith.addf %47, %4 : vector<8x32xf32>
    %49 = math.tanh %48 : vector<8x32xf32>
    %50 = tpu.concatenate %49, %42 in 1 : vector<8x32xf32>, vector<8x32xf32> -> vector<8x64xf32>
    %cst_23 = arith.constant dense<0.000000e+00> : vector<8x32xf32>
    %51 = tpu.matmul %50, %1, %cst_23 {dimension_numbers = #tpu.dot_dimension_numbers<[1], [0], [0], [1], [0, 0, 1, 1], [], []>} : vector<8x64xf32>, vector<64x32xf32>, vector<8x32xf32> -> vector<8x32xf32>
    %52 = arith.addf %51, %7 : vector<8x32xf32>
    %53 = math.tanh %52 : vector<8x32xf32>
    %c4_i32 = arith.constant 4 : i32
    %54 = arith.index_cast %c4_i32 : i32 to index
    %c0_24 = arith.constant 0 : index
    %c0_25 = arith.constant 0 : index
    %55 = vector.load %arg0[%54, %c0_24, %c0_25] : memref<8x8x16xf32, #tpu.memory_space<vmem>>, vector<1x8x16xf32>
    %56 = vector.shape_cast %55 : vector<1x8x16xf32> to vector<8x16xf32>
    %57 = tpu.concatenate %56, %49 in 1 : vector<8x16xf32>, vector<8x32xf32> -> vector<8x48xf32>
    %cst_26 = arith.constant dense<0.000000e+00> : vector<8x32xf32>
    %58 = tpu.matmul %57, %0, %cst_26 {dimension_numbers = #tpu.dot_dimension_numbers<[1], [0], [0], [1], [0, 0, 1, 1], [], []>} : vector<8x48xf32>, vector<48x32xf32>, vector<8x32xf32> -> vector<8x32xf32>
    %59 = arith.addf %58, %4 : vector<8x32xf32>
    %60 = math.tanh %59 : vector<8x32xf32>
    %61 = tpu.concatenate %60, %53 in 1 : vector<8x32xf32>, vector<8x32xf32> -> vector<8x64xf32>
    %cst_27 = arith.constant dense<0.000000e+00> : vector<8x32xf32>
    %62 = tpu.matmul %61, %1, %cst_27 {dimension_numbers = #tpu.dot_dimension_numbers<[1], [0], [0], [1], [0, 0, 1, 1], [], []>} : vector<8x64xf32>, vector<64x32xf32>, vector<8x32xf32> -> vector<8x32xf32>
    %63 = arith.addf %62, %7 : vector<8x32xf32>
    %64 = math.tanh %63 : vector<8x32xf32>
    %c5_i32 = arith.constant 5 : i32
    %65 = arith.index_cast %c5_i32 : i32 to index
    %c0_28 = arith.constant 0 : index
    %c0_29 = arith.constant 0 : index
    %66 = vector.load %arg0[%65, %c0_28, %c0_29] : memref<8x8x16xf32, #tpu.memory_space<vmem>>, vector<1x8x16xf32>
    %67 = vector.shape_cast %66 : vector<1x8x16xf32> to vector<8x16xf32>
    %68 = tpu.concatenate %67, %60 in 1 : vector<8x16xf32>, vector<8x32xf32> -> vector<8x48xf32>
    %cst_30 = arith.constant dense<0.000000e+00> : vector<8x32xf32>
    %69 = tpu.matmul %68, %0, %cst_30 {dimension_numbers = #tpu.dot_dimension_numbers<[1], [0], [0], [1], [0, 0, 1, 1], [], []>} : vector<8x48xf32>, vector<48x32xf32>, vector<8x32xf32> -> vector<8x32xf32>
    %70 = arith.addf %69, %4 : vector<8x32xf32>
    %71 = math.tanh %70 : vector<8x32xf32>
    %72 = tpu.concatenate %71, %64 in 1 : vector<8x32xf32>, vector<8x32xf32> -> vector<8x64xf32>
    %cst_31 = arith.constant dense<0.000000e+00> : vector<8x32xf32>
    %73 = tpu.matmul %72, %1, %cst_31 {dimension_numbers = #tpu.dot_dimension_numbers<[1], [0], [0], [1], [0, 0, 1, 1], [], []>} : vector<8x64xf32>, vector<64x32xf32>, vector<8x32xf32> -> vector<8x32xf32>
    %74 = arith.addf %73, %7 : vector<8x32xf32>
    %75 = math.tanh %74 : vector<8x32xf32>
    %c6_i32 = arith.constant 6 : i32
    %76 = arith.index_cast %c6_i32 : i32 to index
    %c0_32 = arith.constant 0 : index
    %c0_33 = arith.constant 0 : index
    %77 = vector.load %arg0[%76, %c0_32, %c0_33] : memref<8x8x16xf32, #tpu.memory_space<vmem>>, vector<1x8x16xf32>
    %78 = vector.shape_cast %77 : vector<1x8x16xf32> to vector<8x16xf32>
    %79 = tpu.concatenate %78, %71 in 1 : vector<8x16xf32>, vector<8x32xf32> -> vector<8x48xf32>
    %cst_34 = arith.constant dense<0.000000e+00> : vector<8x32xf32>
    %80 = tpu.matmul %79, %0, %cst_34 {dimension_numbers = #tpu.dot_dimension_numbers<[1], [0], [0], [1], [0, 0, 1, 1], [], []>} : vector<8x48xf32>, vector<48x32xf32>, vector<8x32xf32> -> vector<8x32xf32>
    %81 = arith.addf %80, %4 : vector<8x32xf32>
    %82 = math.tanh %81 : vector<8x32xf32>
    %83 = tpu.concatenate %82, %75 in 1 : vector<8x32xf32>, vector<8x32xf32> -> vector<8x64xf32>
    %cst_35 = arith.constant dense<0.000000e+00> : vector<8x32xf32>
    %84 = tpu.matmul %83, %1, %cst_35 {dimension_numbers = #tpu.dot_dimension_numbers<[1], [0], [0], [1], [0, 0, 1, 1], [], []>} : vector<8x64xf32>, vector<64x32xf32>, vector<8x32xf32> -> vector<8x32xf32>
    %85 = arith.addf %84, %7 : vector<8x32xf32>
    %86 = math.tanh %85 : vector<8x32xf32>
    %c7_i32 = arith.constant 7 : i32
    %87 = arith.index_cast %c7_i32 : i32 to index
    %c0_36 = arith.constant 0 : index
    %c0_37 = arith.constant 0 : index
    %88 = vector.load %arg0[%87, %c0_36, %c0_37] : memref<8x8x16xf32, #tpu.memory_space<vmem>>, vector<1x8x16xf32>
    %89 = vector.shape_cast %88 : vector<1x8x16xf32> to vector<8x16xf32>
    %90 = tpu.concatenate %89, %82 in 1 : vector<8x16xf32>, vector<8x32xf32> -> vector<8x48xf32>
    %cst_38 = arith.constant dense<0.000000e+00> : vector<8x32xf32>
    %91 = tpu.matmul %90, %0, %cst_38 {dimension_numbers = #tpu.dot_dimension_numbers<[1], [0], [0], [1], [0, 0, 1, 1], [], []>} : vector<8x48xf32>, vector<48x32xf32>, vector<8x32xf32> -> vector<8x32xf32>
    %92 = arith.addf %91, %4 : vector<8x32xf32>
    %93 = math.tanh %92 : vector<8x32xf32>
    %94 = tpu.concatenate %93, %86 in 1 : vector<8x32xf32>, vector<8x32xf32> -> vector<8x64xf32>
    %cst_39 = arith.constant dense<0.000000e+00> : vector<8x32xf32>
    %95 = tpu.matmul %94, %1, %cst_39 {dimension_numbers = #tpu.dot_dimension_numbers<[1], [0], [0], [1], [0, 0, 1, 1], [], []>} : vector<8x64xf32>, vector<64x32xf32>, vector<8x32xf32> -> vector<8x32xf32>
    %96 = arith.addf %95, %7 : vector<8x32xf32>
    %97 = math.tanh %96 : vector<8x32xf32>
    %c8_i32 = arith.constant 8 : i32
    %c0_40 = arith.constant 0 : index
    %c0_41 = arith.constant 0 : index
    %98 = vector.load %arg5[%c0_40, %c0_41] : memref<32x32xf32, #tpu.memory_space<vmem>>, vector<32x32xf32>
    %cst_42 = arith.constant dense<0.000000e+00> : vector<8x32xf32>
    %99 = tpu.matmul %97, %98, %cst_42 {dimension_numbers = #tpu.dot_dimension_numbers<[1], [0], [0], [1], [0, 0, 1, 1], [], []>} : vector<8x32xf32>, vector<32x32xf32>, vector<8x32xf32> -> vector<8x32xf32>
    %c0_43 = arith.constant 0 : index
    %c0_44 = arith.constant 0 : index
    %100 = vector.load %arg6[%c0_43, %c0_44] : memref<1x32xf32, #tpu.memory_space<vmem>>, vector<1x32xf32>
    %101 = vector.broadcast %100 : vector<1x32xf32> to vector<8x32xf32>
    %102 = arith.addf %99, %101 : vector<8x32xf32>
    %cst_45 = arith.constant 0.000000e+00 : f32
    %103 = vector.broadcast %cst_45 : f32 to vector<8x32xf32>
    %104 = arith.maximumf %102, %103 : vector<8x32xf32>
    %c0_46 = arith.constant 0 : index
    %c0_47 = arith.constant 0 : index
    %105 = vector.load %arg7[%c0_46, %c0_47] : memref<32x4xf32, #tpu.memory_space<vmem>>, vector<32x4xf32>
    %cst_48 = arith.constant dense<0.000000e+00> : vector<8x4xf32>
    %106 = tpu.matmul %104, %105, %cst_48 {dimension_numbers = #tpu.dot_dimension_numbers<[1], [0], [0], [1], [0, 0, 1, 1], [], []>} : vector<8x32xf32>, vector<32x4xf32>, vector<8x4xf32> -> vector<8x4xf32>
    %c0_49 = arith.constant 0 : index
    %c0_50 = arith.constant 0 : index
    %107 = vector.load %arg8[%c0_49, %c0_50] : memref<1x4xf32, #tpu.memory_space<vmem>>, vector<1x4xf32>
    %108 = vector.broadcast %107 : vector<1x4xf32> to vector<8x4xf32>
    %109 = arith.addf %106, %108 : vector<8x4xf32>
    %c0_51 = arith.constant 0 : index
    %c0_52 = arith.constant 0 : index
    %110 = vector.load %arg9[%c0_51, %c0_52] : memref<8x4xf32, #tpu.memory_space<vmem>>, vector<8x4xf32>
    tpu.vector_store %arg9[%c0_51, %c0_52], %109 {strides = array<i32>} : memref<8x4xf32, #tpu.memory_space<vmem>>, vector<8x4xf32>,
    return
  }
}

</mosaic_0001>

<llo_original>
// kernel: _forward_impl.1
$region0: #{_forward_impl.1}
  #allocation0 [shape = 'u32[]', space=smem, size = 0x4, offset = 0x4, fixed_abs, tag = 'smem constant byte address 0x4 - core index']
  #allocation1 [shape = 'u32[144,128]{1,0:T(1,128)}', space=vmem, size = 0x12000, scoped, tag = 'internal scratch']
  %s0 = inlined_call_operand.vmem [shape: f32[8,8,16], index: 0, kind: input, shape index: {}]
  %s1 = inlined_call_operand.vmem [shape: f32[48,32], index: 1, kind: input, shape index: {}]
  %s2 = inlined_call_operand.vmem [shape: f32[1,32], index: 2, kind: input, shape index: {}]
  %s3 = inlined_call_operand.vmem [shape: f32[64,32], index: 3, kind: input, shape index: {}]
  %s4 = inlined_call_operand.vmem [shape: f32[1,32], index: 4, kind: input, shape index: {}]
  %s5 = inlined_call_operand.vmem [shape: f32[32,32], index: 5, kind: input, shape index: {}]
  %s6 = inlined_call_operand.vmem [shape: f32[1,32], index: 6, kind: input, shape index: {}]
  %s7 = inlined_call_operand.vmem [shape: f32[32,4], index: 7, kind: input, shape index: {}]
  %s8 = inlined_call_operand.vmem [shape: f32[1,4], index: 8, kind: input, shape index: {}]
  %s9 = inlined_call_operand.vmem [shape: f32[8,4], index: 9, kind: output, shape index: {}]
  %s10 = sld [smem:[#allocation0]]
  $region46: #{_forward_impl.1} parent=0
    _
  %s12 = ssub.s32 1, %s10
  %s13 = scalar_select 0, %s12, %s10
  // Predicated region
  $region2: #{_forward_impl.1} parent=0 // pred_check
    _
  $region3: #{_forward_impl.1} parent=0 // pred_check_branch
    %15 = sbr.rel (0) target = $region5
  $region4: #{_forward_impl.1} parent=0 // pred_region
    _
  $region5: #{_forward_impl.1} parent=0 // pred_fallthru
    _
  // Predicated region
  $region6: #{_forward_impl.1} parent=0 // pred_check
    _
  $region7: #{_forward_impl.1} parent=0 // pred_check_branch
    %17 = sbr.rel (0) target = $region9
  $region8: #{_forward_impl.1} parent=0 // pred_region
    _
  $region9: #{_forward_impl.1} parent=0 // pred_fallthru
    _
  // Predicated region
  $region10: #{_forward_impl.1} parent=0 // pred_check
    _
  $region11: #{_forward_impl.1} parent=0 // pred_check_branch
    %19 = sbr.rel (0) target = $region13
  $region12: #{_forward_impl.1} parent=0 // pred_region
    _
  $region13: #{_forward_impl.1} parent=0 // pred_fallthru
    _
  // Predicated region
  $region14: #{_forward_impl.1} parent=0 // pred_check
    _
  $region15: #{_forward_impl.1} parent=0 // pred_check_branch
    %21 = sbr.rel (0) target = $region17
  $region16: #{_forward_impl.1} parent=0 // pred_region
    _
  $region17: #{_forward_impl.1} parent=0 // pred_fallthru
    _
  // Predicated region
  $region18: #{_forward_impl.1} parent=0 // pred_check
    _
  $region19: #{_forward_impl.1} parent=0 // pred_check_branch
    %23 = sbr.rel (0) target = $region21
  $region20: #{_forward_impl.1} parent=0 // pred_region
    _
  $region21: #{_forward_impl.1} parent=0 // pred_fallthru
    _
  // Predicated region
  $region22: #{_forward_impl.1} parent=0 // pred_check
    _
  $region23: #{_forward_impl.1} parent=0 // pred_check_branch
    %25 = sbr.rel (0) target = $region25
  $region24: #{_forward_impl.1} parent=0 // pred_region
    _
  $region25: #{_forward_impl.1} parent=0 // pred_fallthru
    _
  // Predicated region
  $region26: #{_forward_impl.1} parent=0 // pred_check
    _
  $region27: #{_forward_impl.1} parent=0 // pred_check_branch
    %27 = sbr.rel (0) target = $region29
  $region28: #{_forward_impl.1} parent=0 // pred_region
    _
  $region29: #{_forward_impl.1} parent=0 // pred_fallthru
    _
  // Predicated region
  $region30: #{_forward_impl.1} parent=0 // pred_check
    _
  $region31: #{_forward_impl.1} parent=0 // pred_check_branch
    %29 = sbr.rel (0) target = $region33
  $region32: #{_forward_impl.1} parent=0 // pred_region
    _
  $region33: #{_forward_impl.1} parent=0 // pred_fallthru
    _
  // Predicated region
  $region34: #{_forward_impl.1} parent=0 // pred_check
    _
  $region35: #{_forward_impl.1} parent=0 // pred_check_branch
    %31 = sbr.rel (0) target = $region37
  $region36: #{_forward_impl.1} parent=0 // pred_region
    _
  $region37: #{_forward_impl.1} parent=0 // pred_fallthru
    _
  %v32 = vld [vmem:[%s1] sm:$0xff]
  %v33 = vld [vmem:[%s1 + $0x8] sm:$0xff]
  %v34 = vld [vmem:[%s1 + $0x10] sm:$0xff]
  %v35 = vld [vmem:[%s1 + $0x18] sm:$0xff]
  %v36 = vld [vmem:[%s1 + $0x20] sm:$0xff]
  %v37 = vld [vmem:[%s1 + $0x28] sm:$0xff]
  %v38 = vld [vmem:[%s3] sm:$0xff]
  %v39 = vld [vmem:[%s3 + $0x8] sm:$0xff]
  %v40 = vld [vmem:[%s3 + $0x10] sm:$0xff]
  %v41 = vld [vmem:[%s3 + $0x18] sm:$0xff]
  %v42 = vld [vmem:[%s3 + $0x20] sm:$0xff]
  %v43 = vld [vmem:[%s3 + $0x28] sm:$0xff]
  %v44 = vld [vmem:[%s3 + $0x30] sm:$0xff]
  %v45 = vld [vmem:[%s3 + $0x38] sm:$0xff]
  %v46 = vld [vmem:[%s2] sm:$0x1]
  %v48 = vlaneseq
  %v49 = vshrl.u32 %v48, 7
  %v50 = vsub.s32 0, %v49
  %v51 = vrot.slane %v46, %v50
  %v53 = vld [vmem:[%s4] sm:$0x1]
  %v55 = vlaneseq
  %v56 = vshrl.u32 %v55, 7
  %v57 = vsub.s32 0, %v56
  %v58 = vrot.slane %v53, %v57
  %v60 = vld [vmem:[%s0] sm:$0xff]
  %vm61 = vcmask 130048
  %v62 = vsel %vm61, %v60, 0.0
  %vm63 = vcmask 392192
  %v65 = vsel %vm63, %v62, 0
  %67 = vmatprep.subr.mxu0 0.0
  %68 = vmatpush1.msra.mxu0 %v32
  %69 = vmatprep.subr.mxu0 0.0
  %70 = vmatpush1.msra.mxu0 %v33
  %71 = vmatprep.subr.mxu0 0.0
  %72 = vmatpush1.msra.mxu0 %v34
  %73 = vmatprep.subr.mxu0 0.0
  %74 = vmatpush1.msra.mxu0 %v35
  %75 = vmatprep.subr.mxu0 0.0
  %76 = vmatpush1.msra.mxu0 %v36
  %77 = vmatprep.subr.mxu0 0.0
  %78 = vmatpush1.msra.mxu0 %v37
  %79 = vmatprep.subr.mxu0 0.0
  %80 = vmatpush1.msra.mxu0 0.0
  %81 = vmatprep.subr.mxu0 0.0
  %82 = vmatpush1.msra.mxu0 0.0
  %83 = vmatprep.subr.mxu0 0.0
  %84 = vmatpush1.msra.mxu0 0.0
  %85 = vmatprep.subr.mxu0 0.0
  %86 = vmatpush1.msra.mxu0 0.0
  %87 = vmatprep.subr.mxu0 0.0
  %88 = vmatpush1.msra.mxu0 0.0
  %89 = vmatprep.subr.mxu0 0.0
  %90 = vmatpush1.msra.mxu0 0.0
  %91 = vmatprep.subr.mxu0 0.0
  %92 = vmatpush1.msra.mxu0 0.0
  %93 = vmatprep.subr.mxu0 0.0
  %94 = vmatpush1.msra.mxu0 0.0
  %95 = vmatprep.subr.mxu0 0.0
  %96 = vmatpush1.msra.mxu0 0.0
  %97 = vmatprep.subr.mxu0 0.0
  %98 = vmatpush1.msra.mxu0 0.0
  %99 = vmatprep.subr.mxu0 0.0
  %100 = vmatpush1.msra.mxu0 0.0
  %101 = vmatprep.subr.mxu0 0.0
  %102 = vmatpush1.msra.mxu0 0.0
  %103 = vmatprep.subr.mxu0 0.0
  %104 = vmatpush1.msra.mxu0 0.0
  %105 = vmatprep.subr.mxu0 0.0
  %106 = vmatpush1.msra.mxu0 0.0
  %107 = vmatprep.subr.mxu0 0.0
  %108 = vmatpush1.msra.mxu0 0.0
  %109 = vmatprep.subr.mxu0 0.0
  %110 = vmatpush1.msra.mxu0 0.0
  %111 = vmatprep.subr.mxu0 0.0
  %112 = vmatpush1.msra.mxu0 0.0
  %113 = vmatprep.subr.mxu0 0.0
  %114 = vmatpush1.msra.mxu0 0.0
  %115 = vmatprep.subr.mxu0 0.0
  %116 = vmatpush1.msra.mxu0 0.0
  %117 = vmatprep.subr.mxu0 0.0
  %118 = vmatpush1.msra.mxu0 0.0
  %119 = vmatprep.subr.mxu0 0.0
  %120 = vmatpush1.msra.mxu0 0.0
  %121 = vmatprep.subr.mxu0 0.0
  %122 = vmatpush1.msra.mxu0 0.0
  %123 = vmatprep.subr.mxu0 0.0
  %124 = vmatpush1.msra.mxu0 0.0
  %125 = vmatprep.subr.mxu0 0.0
  %126 = vmatpush1.msra.mxu0 0.0
  %127 = vmatprep.subr.mxu0 0.0
  %128 = vmatpush1.msra.mxu0 0.0
  %129 = vmatprep.subr.mxu0 0.0
  %130 = vmatpush1.msra.mxu0 0.0
  %131 = vmatprep.mubr.f32.mxu0 0.0
  %132 = vmatmul.mubr.f32.gmra.mrb[0].mxu0 %v65
  %v133 = vpop.f32.mrb[0].mxu0
  %v134 = vadd.f32 %v51, %v133
  %v135 = vpop.f32.mrb[0].mxu0
  %136 = vdwg.mxu0
  %v137 = vtanh.pop %v134
  %vm138 = vcmask 261120
  %v139 = vsel %vm138, %v137, 0.0
  %vm140 = vcmask 523264
  %v142 = vsel %vm140, %v139, 0
  %144 = vmatprep.subr.mxu0 0.0
  %145 = vmatpush1.msra.mxu0 %v38
  %146 = vmatprep.subr.mxu0 0.0
  %147 = vmatpush1.msra.mxu0 %v39
  %148 = vmatprep.subr.mxu0 0.0
  %149 = vmatpush1.msra.mxu0 %v40
  %150 = vmatprep.subr.mxu0 0.0
  %151 = vmatpush1.msra.mxu0 %v41
  %152 = vmatprep.subr.mxu0 0.0
  %153 = vmatpush1.msra.mxu0 %v42
  %154 = vmatprep.subr.mxu0 0.0
  %155 = vmatpush1.msra.mxu0 %v43
  %156 = vmatprep.subr.mxu0 0.0
  %157 = vmatpush1.msra.mxu0 %v44
  %158 = vmatprep.subr.mxu0 0.0
  %159 = vmatpush1.msra.mxu0 %v45
  %160 = vmatprep.subr.mxu0 0.0
  %161 = vmatpush1.msra.mxu0 0.0
  %162 = vmatprep.subr.mxu0 0.0
  %163 = vmatpush1.msra.mxu0 0.0
  %164 = vmatprep.subr.mxu0 0.0
  %165 = vmatpush1.msra.mxu0 0.0
  %166 = vmatprep.subr.mxu0 0.0
  %167 = vmatpush1.msra.mxu0 0.0
  %168 = vmatprep.subr.mxu0 0.0
  %169 = vmatpush1.msra.mxu0 0.0
  %170 = vmatprep.subr.mxu0 0.0
  %171 = vmatpush1.msra.mxu0 0.0
  %172 = vmatprep.subr.mxu0 0.0
  %173 = vmatpush1.msra.mxu0 0.0
  %174 = vmatprep.subr.mxu0 0.0
  %175 = vmatpush1.msra.mxu0 0.0
  %176 = vmatprep.subr.mxu0 0.0
  %177 = vmatpush1.msra.mxu0 0.0
  %178 = vmatprep.subr.mxu0 0.0
  %179 = vmatpush1.msra.mxu0 0.0
  %180 = vmatprep.subr.mxu0 0.0
  %181 = vmatpush1.msra.mxu0 0.0
  %182 = vmatprep.subr.mxu0 0.0
  %183 = vmatpush1.msra.mxu0 0.0
  %184 = vmatprep.subr.mxu0 0.0
  %185 = vmatpush1.msra.mxu0 0.0
  %186 = vmatprep.subr.mxu0 0.0
  %187 = vmatpush1.msra.mxu0 0.0
  %188 = vmatprep.subr.mxu0 0.0
  %189 = vmatpush1.msra.mxu0 0.0
  %190 = vmatprep.subr.mxu0 0.0
  %191 = vmatpush1.msra.mxu0 0.0
  %192 = vmatprep.subr.mxu0 0.0
  %193 = vmatpush1.msra.mxu0 0.0
  %194 = vmatprep.subr.mxu0 0.0
  %195 = vmatpush1.msra.mxu0 0.0
  %196 = vmatprep.subr.mxu0 0.0
  %197 = vmatpush1.msra.mxu0 0.0
  %198 = vmatprep.subr.mxu0 0.0
  %199 = vmatpush1.msra.mxu0 0.0
  %200 = vmatprep.subr.mxu0 0.0
  %201 = vmatpush1.msra.mxu0 0.0
  %202 = vmatprep.subr.mxu0 0.0
  %203 = vmatpush1.msra.mxu0 0.0
  %204 = vmatprep.subr.mxu0 0.0
  %205 = vmatpush1.msra.mxu0 0.0
  %206 = vmatprep.subr.mxu0 0.0
  %207 = vmatpush1.msra.mxu0 0.0
  %208 = vmatprep.mubr.f32.mxu0 0.0
  %209 = vmatmul.mubr.f32.gmra.mrb[0].mxu0 %v142
  %v210 = vpop.f32.mrb[0].mxu0
  %v211 = vadd.f32 %v58, %v210
  %v212 = vpop.f32.mrb[0].mxu0
  %213 = vdwg.mxu0
  %v214 = vtanh.pop %v211
  %s215 = scalar_lea.vmem %s0, 8
  %v216 = vld [vmem:[%s215] sm:$0xff]
  %218 = vrot.lane.b32.xlu0 %v137, 16
  %v219 = vpop.permute.xlu0 %218
  %v221 = vsel %vm61, %v216, %v219
  %v223 = vsel %vm63, %v221, 0
  %225 = vmatprep.subr.mxu0 0.0
  %226 = vmatpush1.msra.mxu0 %v32
  %227 = vmatprep.subr.mxu0 0.0
  %228 = vmatpush1.msra.mxu0 %v33
  %229 = vmatprep.subr.mxu0 0.0
  %230 = vmatpush1.msra.mxu0 %v34
  %231 = vmatprep.subr.mxu0 0.0
  %232 = vmatpush1.msra.mxu0 %v35
  %233 = vmatprep.subr.mxu0 0.0
  %234 = vmatpush1.msra.mxu0 %v36
  %235 = vmatprep.subr.mxu0 0.0
  %236 = vmatpush1.msra.mxu0 %v37
  %237 = vmatprep.subr.mxu0 0.0
  %238 = vmatpush1.msra.mxu0 0.0
  %239 = vmatprep.subr.mxu0 0.0
  %240 = vmatpush1.msra.mxu0 0.0
  %241 = vmatprep.subr.mxu0 0.0
  %242 = vmatpush1.msra.mxu0 0.0
  %243 = vmatprep.subr.mxu0 0.0
  %244 = vmatpush1.msra.mxu0 0.0
  %245 = vmatprep.subr.mxu0 0.0
  %246 = vmatpush1.msra.mxu0 0.0
  %247 = vmatprep.subr.mxu0 0.0
  %248 = vmatpush1.msra.mxu0 0.0
  %249 = vmatprep.subr.mxu0 0.0
  %250 = vmatpush1.msra.mxu0 0.0
  %251 = vmatprep.subr.mxu0 0.0
  %252 = vmatpush1.msra.mxu0 0.0
  %253 = vmatprep.subr.mxu0 0.0
  %254 = vmatpush1.msra.mxu0 0.0
  %255 = vmatprep.subr.mxu0 0.0
  %256 = vmatpush1.msra.mxu0 0.0
  %257 = vmatprep.subr.mxu0 0.0
  %258 = vmatpush1.msra.mxu0 0.0
  %259 = vmatprep.subr.mxu0 0.0
  %260 = vmatpush1.msra.mxu0 0.0
  %261 = vmatprep.subr.mxu0 0.0
  %262 = vmatpush1.msra.mxu0 0.0
  %263 = vmatprep.subr.mxu0 0.0
  %264 = vmatpush1.msra.mxu0 0.0
  %265 = vmatprep.subr.mxu0 0.0
  %266 = vmatpush1.msra.mxu0 0.0
  %267 = vmatprep.subr.mxu0 0.0
  %268 = vmatpush1.msra.mxu0 0.0
  %269 = vmatprep.subr.mxu0 0.0
  %270 = vmatpush1.msra.mxu0 0.0
  %271 = vmatprep.subr.mxu0 0.0
  %272 = vmatpush1.msra.mxu0 0.0
  %273 = vmatprep.subr.mxu0 0.0
  %274 = vmatpush1.msra.mxu0 0.0
  %275 = vmatprep.subr.mxu0 0.0
  %276 = vmatpush1.msra.mxu0 0.0
  %277 = vmatprep.subr.mxu0 0.0
  %278 = vmatpush1.msra.mxu0 0.0
  %279 = vmatprep.subr.mxu0 0.0
  %280 = vmatpush1.msra.mxu0 0.0
  %281 = vmatprep.subr.mxu0 0.0
  %282 = vmatpush1.msra.mxu0 0.0
  %283 = vmatprep.subr.mxu0 0.0
  %284 = vmatpush1.msra.mxu0 0.0
  %285 = vmatprep.subr.mxu0 0.0
  %286 = vmatpush1.msra.mxu0 0.0
  %287 = vmatprep.subr.mxu0 0.0
  %288 = vmatpush1.msra.mxu0 0.0
  %289 = vmatprep.mubr.f32.mxu0 0.0
  %290 = vmatmul.mubr.f32.gmra.mrb[0].mxu0 %v223
  %v291 = vpop.f32.mrb[0].mxu0
  %v292 = vadd.f32 %v51, %v291
  %v293 = vpop.f32.mrb[0].mxu0
  %294 = vdwg.mxu0
  %v295 = vtanh.pop %v292
  %297 = vrot.lane.b32.xlu0 %v214, 32
  %v298 = vpop.permute.xlu0 %297
  %v300 = vsel %vm138, %v295, %v298
  %v302 = vsel %vm140, %v300, 0
  %304 = vmatprep.subr.mxu0 0.0
  %305 = vmatpush1.msra.mxu0 %v38
  %306 = vmatprep.subr.mxu0 0.0
  %307 = vmatpush1.msra.mxu0 %v39
  %308 = vmatprep.subr.mxu0 0.0
  %309 = vmatpush1.msra.mxu0 %v40
  %310 = vmatprep.subr.mxu0 0.0
  %311 = vmatpush1.msra.mxu0 %v41
  %312 = vmatprep.subr.mxu0 0.0
  %313 = vmatpush1.msra.mxu0 %v42
  %314 = vmatprep.subr.mxu0 0.0
  %315 = vmatpush1.msra.mxu0 %v43
  %316 = vmatprep.subr.mxu0 0.0
  %317 = vmatpush1.msra.mxu0 %v44
  %318 = vmatprep.subr.mxu0 0.0
  %319 = vmatpush1.msra.mxu0 %v45
  %320 = vmatprep.subr.mxu0 0.0
  %321 = vmatpush1.msra.mxu0 0.0
  %322 = vmatprep.subr.mxu0 0.0
  %323 = vmatpush1.msra.mxu0 0.0
  %324 = vmatprep.subr.mxu0 0.0
  %325 = vmatpush1.msra.mxu0 0.0
  %326 = vmatprep.subr.mxu0 0.0
  %327 = vmatpush1.msra.mxu0 0.0
  %328 = vmatprep.subr.mxu0 0.0
  %329 = vmatpush1.msra.mxu0 0.0
  %330 = vmatprep.subr.mxu0 0.0
  %331 = vmatpush1.msra.mxu0 0.0
  %332 = vmatprep.subr.mxu0 0.0
  %333 = vmatpush1.msra.mxu0 0.0
  %334 = vmatprep.subr.mxu0 0.0
  %335 = vmatpush1.msra.mxu0 0.0
  %336 = vmatprep.subr.mxu0 0.0
  %337 = vmatpush1.msra.mxu0 0.0
  %338 = vmatprep.subr.mxu0 0.0
  %339 = vmatpush1.msra.mxu0 0.0
  %340 = vmatprep.subr.mxu0 0.0
  %341 = vmatpush1.msra.mxu0 0.0
  %342 = vmatprep.subr.mxu0 0.0
  %343 = vmatpush1.msra.mxu0 0.0
  %344 = vmatprep.subr.mxu0 0.0
  %345 = vmatpush1.msra.mxu0 0.0
  %346 = vmatprep.subr.mxu0 0.0
  %347 = vmatpush1.msra.mxu0 0.0
  %348 = vmatprep.subr.mxu0 0.0
  %349 = vmatpush1.msra.mxu0 0.0
  %350 = vmatprep.subr.mxu0 0.0
  %351 = vmatpush1.msra.mxu0 0.0
  %352 = vmatprep.subr.mxu0 0.0
  %353 = vmatpush1.msra.mxu0 0.0
  %354 = vmatprep.subr.mxu0 0.0
  %355 = vmatpush1.msra.mxu0 0.0
  %356 = vmatprep.subr.mxu0 0.0
  %357 = vmatpush1.msra.mxu0 0.0
  %358 = vmatprep.subr.mxu0 0.0
  %359 = vmatpush1.msra.mxu0 0.0
  %360 = vmatprep.subr.mxu0 0.0
  %361 = vmatpush1.msra.mxu0 0.0
  %362 = vmatprep.subr.mxu0 0.0
  %363 = vmatpush1.msra.mxu0 0.0
  %364 = vmatprep.subr.mxu0 0.0
  %365 = vmatpush1.msra.mxu0 0.0
  %366 = vmatprep.subr.mxu0 0.0
  %367 = vmatpush1.msra.mxu0 0.0
  %368 = vmatprep.mubr.f32.mxu0 0.0
  %369 = vmatmul.mubr.f32.gmra.mrb[0].mxu0 %v302
  %v370 = vpop.f32.mrb[0].mxu0
  %v371 = vadd.f32 %v58, %v370
  %v372 = vpop.f32.mrb[0].mxu0
  %373 = vdwg.mxu0
  %v374 = vtanh.pop %v371
  %s375 = scalar_lea.vmem %s0, 16
  %v376 = vld [vmem:[%s375] sm:$0xff]
  %378 = vrot.lane.b32.xlu0 %v295, 16
  %v379 = vpop.permute.xlu0 %378
  %v381 = vsel %vm61, %v376, %v379
  %v383 = vsel %vm63, %v381, 0
  %385 = vmatprep.subr.mxu0 0.0
  %386 = vmatpush1.msra.mxu0 %v32
  %387 = vmatprep.subr.mxu0 0.0
  %388 = vmatpush1.msra.mxu0 %v33
  %389 = vmatprep.subr.mxu0 0.0
  %390 = vmatpush1.msra.mxu0 %v34
  %391 = vmatprep.subr.mxu0 0.0
  %392 = vmatpush1.msra.mxu0 %v35
  %393 = vmatprep.subr.mxu0 0.0
  %394 = vmatpush1.msra.mxu0 %v36
  %395 = vmatprep.subr.mxu0 0.0
  %396 = vmatpush1.msra.mxu0 %v37
  %397 = vmatprep.subr.mxu0 0.0
  %398 = vmatpush1.msra.mxu0 0.0
  %399 = vmatprep.subr.mxu0 0.0
  %400 = vmatpush1.msra.mxu0 0.0
  %401 = vmatprep.subr.mxu0 0.0
  %402 = vmatpush1.msra.mxu0 0.0
  %403 = vmatprep.subr.mxu0 0.0
  %404 = vmatpush1.msra.mxu0 0.0
  %405 = vmatprep.subr.mxu0 0.0
  %406 = vmatpush1.msra.mxu0 0.0
  %407 = vmatprep.subr.mxu0 0.0
  %408 = vmatpush1.msra.mxu0 0.0
  %409 = vmatprep.subr.mxu0 0.0
  %410 = vmatpush1.msra.mxu0 0.0
  %411 = vmatprep.subr.mxu0 0.0
  %412 = vmatpush1.msra.mxu0 0.0
  %413 = vmatprep.subr.mxu0 0.0
  %414 = vmatpush1.msra.mxu0 0.0
  %415 = vmatprep.subr.mxu0 0.0
  %416 = vmatpush1.msra.mxu0 0.0
  %417 = vmatprep.subr.mxu0 0.0
  %418 = vmatpush1.msra.mxu0 0.0
  %419 = vmatprep.subr.mxu0 0.0
  %420 = vmatpush1.msra.mxu0 0.0
  %421 = vmatprep.subr.mxu0 0.0
  %422 = vmatpush1.msra.mxu0 0.0
  %423 = vmatprep.subr.mxu0 0.0
  %424 = vmatpush1.msra.mxu0 0.0
  %425 = vmatprep.subr.mxu0 0.0
  %426 = vmatpush1.msra.mxu0 0.0
  %427 = vmatprep.subr.mxu0 0.0
  %428 = vmatpush1.msra.mxu0 0.0
  %429 = vmatprep.subr.mxu0 0.0
  %430 = vmatpush1.msra.mxu0 0.0
  %431 = vmatprep.subr.mxu0 0.0
  %432 = vmatpush1.msra.mxu0 0.0
  %433 = vmatprep.subr.mxu0 0.0
  %434 = vmatpush1.msra.mxu0 0.0
  %435 = vmatprep.subr.mxu0 0.0
  %436 = vmatpush1.msra.mxu0 0.0
  %437 = vmatprep.subr.mxu0 0.0
  %438 = vmatpush1.msra.mxu0 0.0
  %439 = vmatprep.subr.mxu0 0.0
  %440 = vmatpush1.msra.mxu0 0.0
  %441 = vmatprep.subr.mxu0 0.0
  %442 = vmatpush1.msra.mxu0 0.0
  %443 = vmatprep.subr.mxu0 0.0
  %444 = vmatpush1.msra.mxu0 0.0
  %445 = vmatprep.subr.mxu0 0.0
  %446 = vmatpush1.msra.mxu0 0.0
  %447 = vmatprep.subr.mxu0 0.0
  %448 = vmatpush1.msra.mxu0 0.0
  %449 = vmatprep.mubr.f32.mxu0 0.0
  %450 = vmatmul.mubr.f32.gmra.mrb[0].mxu0 %v383
  %v451 = vpop.f32.mrb[0].mxu0
  %v452 = vadd.f32 %v51, %v451
  %v453 = vpop.f32.mrb[0].mxu0
  %454 = vdwg.mxu0
  %v455 = vtanh.pop %v452
  %457 = vrot.lane.b32.xlu0 %v374, 32
  %v458 = vpop.permute.xlu0 %457
  %v460 = vsel %vm138, %v455, %v458
  %v462 = vsel %vm140, %v460, 0
  %464 = vmatprep.subr.mxu0 0.0
  %465 = vmatpush1.msra.mxu0 %v38
  %466 = vmatprep.subr.mxu0 0.0
  %467 = vmatpush1.msra.mxu0 %v39
  %468 = vmatprep.subr.mxu0 0.0
  %469 = vmatpush1.msra.mxu0 %v40
  %470 = vmatprep.subr.mxu0 0.0
  %471 = vmatpush1.msra.mxu0 %v41
  %472 = vmatprep.subr.mxu0 0.0
  %473 = vmatpush1.msra.mxu0 %v42
  %474 = vmatprep.subr.mxu0 0.0
  %475 = vmatpush1.msra.mxu0 %v43
  %476 = vmatprep.subr.mxu0 0.0
  %477 = vmatpush1.msra.mxu0 %v44
  %478 = vmatprep.subr.mxu0 0.0
  %479 = vmatpush1.msra.mxu0 %v45
  %480 = vmatprep.subr.mxu0 0.0
  %481 = vmatpush1.msra.mxu0 0.0
  %482 = vmatprep.subr.mxu0 0.0
  %483 = vmatpush1.msra.mxu0 0.0
  %484 = vmatprep.subr.mxu0 0.0
  %485 = vmatpush1.msra.mxu0 0.0
  %486 = vmatprep.subr.mxu0 0.0
  %487 = vmatpush1.msra.mxu0 0.0
  %488 = vmatprep.subr.mxu0 0.0
  %489 = vmatpush1.msra.mxu0 0.0
  %490 = vmatprep.subr.mxu0 0.0
  %491 = vmatpush1.msra.mxu0 0.0
  %492 = vmatprep.subr.mxu0 0.0
  %493 = vmatpush1.msra.mxu0 0.0
  %494 = vmatprep.subr.mxu0 0.0
  %495 = vmatpush1.msra.mxu0 0.0
  %496 = vmatprep.subr.mxu0 0.0
  %497 = vmatpush1.msra.mxu0 0.0
  %498 = vmatprep.subr.mxu0 0.0
  %499 = vmatpush1.msra.mxu0 0.0
  %500 = vmatprep.subr.mxu0 0.0
  %501 = vmatpush1.msra.mxu0 0.0
  %502 = vmatprep.subr.mxu0 0.0
  %503 = vmatpush1.msra.mxu0 0.0
  %504 = vmatprep.subr.mxu0 0.0
  %505 = vmatpush1.msra.mxu0 0.0
  %506 = vmatprep.subr.mxu0 0.0
  %507 = vmatpush1.msra.mxu0 0.0
  %508 = vmatprep.subr.mxu0 0.0
  %509 = vmatpush1.msra.mxu0 0.0
  %510 = vmatprep.subr.mxu0 0.0
  %511 = vmatpush1.msra.mxu0 0.0
  %512 = vmatprep.subr.mxu0 0.0
  %513 = vmatpush1.msra.mxu0 0.0
  %514 = vmatprep.subr.mxu0 0.0
  %515 = vmatpush1.msra.mxu0 0.0
  %516 = vmatprep.subr.mxu0 0.0
  %517 = vmatpush1.msra.mxu0 0.0
  %518 = vmatprep.subr.mxu0 0.0
  %519 = vmatpush1.msra.mxu0 0.0
  %520 = vmatprep.subr.mxu0 0.0
  %521 = vmatpush1.msra.mxu0 0.0
  %522 = vmatprep.subr.mxu0 0.0
  %523 = vmatpush1.msra.mxu0 0.0
  %524 = vmatprep.subr.mxu0 0.0
  %525 = vmatpush1.msra.mxu0 0.0
  %526 = vmatprep.subr.mxu0 0.0
  %527 = vmatpush1.msra.mxu0 0.0
  %528 = vmatprep.mubr.f32.mxu0 0.0
  %529 = vmatmul.mubr.f32.gmra.mrb[0].mxu0 %v462
  %v530 = vpop.f32.mrb[0].mxu0
  %v531 = vadd.f32 %v58, %v530
  %v532 = vpop.f32.mrb[0].mxu0
  %533 = vdwg.mxu0
  %v534 = vtanh.pop %v531
  %s535 = scalar_lea.vmem %s0, 24
  %v536 = vld [vmem:[%s535] sm:$0xff]
  %538 = vrot.lane.b32.xlu0 %v455, 16
  %v539 = vpop.permute.xlu0 %538
  %v541 = vsel %vm61, %v536, %v539
  %v543 = vsel %vm63, %v541, 0
  %545 = vmatprep.subr.mxu0 0.0
  %546 = vmatpush1.msra.mxu0 %v32
  %547 = vmatprep.subr.mxu0 0.0
  %548 = vmatpush1.msra.mxu0 %v33
  %549 = vmatprep.subr.mxu0 0.0
  %550 = vmatpush1.msra.mxu0 %v34
  %551 = vmatprep.subr.mxu0 0.0
  %552 = vmatpush1.msra.mxu0 %v35
  %553 = vmatprep.subr.mxu0 0.0
  %554 = vmatpush1.msra.mxu0 %v36
  %555 = vmatprep.subr.mxu0 0.0
  %556 = vmatpush1.msra.mxu0 %v37
  %557 = vmatprep.subr.mxu0 0.0
  %558 = vmatpush1.msra.mxu0 0.0
  %559 = vmatprep.subr.mxu0 0.0
  %560 = vmatpush1.msra.mxu0 0.0
  %561 = vmatprep.subr.mxu0 0.0
  %562 = vmatpush1.msra.mxu0 0.0
  %563 = vmatprep.subr.mxu0 0.0
  %564 = vmatpush1.msra.mxu0 0.0
  %565 = vmatprep.subr.mxu0 0.0
  %566 = vmatpush1.msra.mxu0 0.0
  %567 = vmatprep.subr.mxu0 0.0
  %568 = vmatpush1.msra.mxu0 0.0
  %569 = vmatprep.subr.mxu0 0.0
  %570 = vmatpush1.msra.mxu0 0.0
  %571 = vmatprep.subr.mxu0 0.0
  %572 = vmatpush1.msra.mxu0 0.0
  %573 = vmatprep.subr.mxu0 0.0
  %574 = vmatpush1.msra.mxu0 0.0
  %575 = vmatprep.subr.mxu0 0.0
  %576 = vmatpush1.msra.mxu0 0.0
  %577 = vmatprep.subr.mxu0 0.0
  %578 = vmatpush1.msra.mxu0 0.0
  %579 = vmatprep.subr.mxu0 0.0
  %580 = vmatpush1.msra.mxu0 0.0
  %581 = vmatprep.subr.mxu0 0.0
  %582 = vmatpush1.msra.mxu0 0.0
  %583 = vmatprep.subr.mxu0 0.0
  %584 = vmatpush1.msra.mxu0 0.0
  %585 = vmatprep.subr.mxu0 0.0
  %586 = vmatpush1.msra.mxu0 0.0
  %587 = vmatprep.subr.mxu0 0.0
  %588 = vmatpush1.msra.mxu0 0.0
  %589 = vmatprep.subr.mxu0 0.0
  %590 = vmatpush1.msra.mxu0 0.0
  %591 = vmatprep.subr.mxu0 0.0
  %592 = vmatpush1.msra.mxu0 0.0
  %593 = vmatprep.subr.mxu0 0.0
  %594 = vmatpush1.msra.mxu0 0.0
  %595 = vmatprep.subr.mxu0 0.0
  %596 = vmatpush1.msra.mxu0 0.0
  %597 = vmatprep.subr.mxu0 0.0
  %598 = vmatpush1.msra.mxu0 0.0
  %599 = vmatprep.subr.mxu0 0.0
  %600 = vmatpush1.msra.mxu0 0.0
  %601 = vmatprep.subr.mxu0 0.0
  %602 = vmatpush1.msra.mxu0 0.0
  %603 = vmatprep.subr.mxu0 0.0
  %604 = vmatpush1.msra.mxu0 0.0
  %605 = vmatprep.subr.mxu0 0.0
  %606 = vmatpush1.msra.mxu0 0.0
  %607 = vmatprep.subr.mxu0 0.0
  %608 = vmatpush1.msra.mxu0 0.0
  %609 = vmatprep.mubr.f32.mxu0 0.0
  %610 = vmatmul.mubr.f32.gmra.mrb[0].mxu0 %v543
  %v611 = vpop.f32.mrb[0].mxu0
  %v612 = vadd.f32 %v51, %v611
  %v613 = vpop.f32.mrb[0].mxu0
  %614 = vdwg.mxu0
  %v615 = vtanh.pop %v612
  %617 = vrot.lane.b32.xlu0 %v534, 32
  %v618 = vpop.permute.xlu0 %617
  %v620 = vsel %vm138, %v615, %v618
  %v622 = vsel %vm140, %v620, 0
  %624 = vmatprep.subr.mxu0 0.0
  %625 = vmatpush1.msra.mxu0 %v38
  %626 = vmatprep.subr.mxu0 0.0
  %627 = vmatpush1.msra.mxu0 %v39
  %628 = vmatprep.subr.mxu0 0.0
  %629 = vmatpush1.msra.mxu0 %v40
  %630 = vmatprep.subr.mxu0 0.0
  %631 = vmatpush1.msra.mxu0 %v41
  %632 = vmatprep.subr.mxu0 0.0
  %633 = vmatpush1.msra.mxu0 %v42
  %634 = vmatprep.subr.mxu0 0.0
  %635 = vmatpush1.msra.mxu0 %v43
  %636 = vmatprep.subr.mxu0 0.0
  %637 = vmatpush1.msra.mxu0 %v44
  %638 = vmatprep.subr.mxu0 0.0
  %639 = vmatpush1.msra.mxu0 %v45
  %640 = vmatprep.subr.mxu0 0.0
  %641 = vmatpush1.msra.mxu0 0.0
  %642 = vmatprep.subr.mxu0 0.0
  %643 = vmatpush1.msra.mxu0 0.0
  %644 = vmatprep.subr.mxu0 0.0
  %645 = vmatpush1.msra.mxu0 0.0
  %646 = vmatprep.subr.mxu0 0.0
  %647 = vmatpush1.msra.mxu0 0.0
  %648 = vmatprep.subr.mxu0 0.0
  %649 = vmatpush1.msra.mxu0 0.0
  %650 = vmatprep.subr.mxu0 0.0
  %651 = vmatpush1.msra.mxu0 0.0
  %652 = vmatprep.subr.mxu0 0.0
  %653 = vmatpush1.msra.mxu0 0.0
  %654 = vmatprep.subr.mxu0 0.0
  %655 = vmatpush1.msra.mxu0 0.0
  %656 = vmatprep.subr.mxu0 0.0
  %657 = vmatpush1.msra.mxu0 0.0
  %658 = vmatprep.subr.mxu0 0.0
  %659 = vmatpush1.msra.mxu0 0.0
  %660 = vmatprep.subr.mxu0 0.0
  %661 = vmatpush1.msra.mxu0 0.0
  %662 = vmatprep.subr.mxu0 0.0
  %663 = vmatpush1.msra.mxu0 0.0
  %664 = vmatprep.subr.mxu0 0.0
  %665 = vmatpush1.msra.mxu0 0.0
  %666 = vmatprep.subr.mxu0 0.0
  %667 = vmatpush1.msra.mxu0 0.0
  %668 = vmatprep.subr.mxu0 0.0
  %669 = vmatpush1.msra.mxu0 0.0
  %670 = vmatprep.subr.mxu0 0.0
  %671 = vmatpush1.msra.mxu0 0.0
  %672 = vmatprep.subr.mxu0 0.0
  %673 = vmatpush1.msra.mxu0 0.0
  %674 = vmatprep.subr.mxu0 0.0
  %675 = vmatpush1.msra.mxu0 0.0
  %676 = vmatprep.subr.mxu0 0.0
  %677 = vmatpush1.msra.mxu0 0.0
  %678 = vmatprep.subr.mxu0 0.0
  %679 = vmatpush1.msra.mxu0 0.0
  %680 = vmatprep.subr.mxu0 0.0
  %681 = vmatpush1.msra.mxu0 0.0
  %682 = vmatprep.subr.mxu0 0.0
  %683 = vmatpush1.msra.mxu0 0.0
  %684 = vmatprep.subr.mxu0 0.0
  %685 = vmatpush1.msra.mxu0 0.0
  %686 = vmatprep.subr.mxu0 0.0
  %687 = vmatpush1.msra.mxu0 0.0
  %688 = vmatprep.mubr.f32.mxu0 0.0
  %689 = vmatmul.mubr.f32.gmra.mrb[0].mxu0 %v622
  %v690 = vpop.f32.mrb[0].mxu0
  %v691 = vadd.f32 %v58, %v690
  %v692 = vpop.f32.mrb[0].mxu0
  %693 = vdwg.mxu0
  %v694 = vtanh.pop %v691
  %s695 = scalar_lea.vmem %s0, 32
  %v696 = vld [vmem:[%s695] sm:$0xff]
  %698 = vrot.lane.b32.xlu0 %v615, 16
  %v699 = vpop.permute.xlu0 %698
  %v701 = vsel %vm61, %v696, %v699
  %v703 = vsel %vm63, %v701, 0
  %705 = vmatprep.subr.mxu0 0.0
  %706 = vmatpush1.msra.mxu0 %v32
  %707 = vmatprep.subr.mxu0 0.0
  %708 = vmatpush1.msra.mxu0 %v33
  %709 = vmatprep.subr.mxu0 0.0
  %710 = vmatpush1.msra.mxu0 %v34
  %711 = vmatprep.subr.mxu0 0.0
  %712 = vmatpush1.msra.mxu0 %v35
  %713 = vmatprep.subr.mxu0 0.0
  %714 = vmatpush1.msra.mxu0 %v36
  %715 = vmatprep.subr.mxu0 0.0
  %716 = vmatpush1.msra.mxu0 %v37
  %717 = vmatprep.subr.mxu0 0.0
  %718 = vmatpush1.msra.mxu0 0.0
  %719 = vmatprep.subr.mxu0 0.0
  %720 = vmatpush1.msra.mxu0 0.0
  %721 = vmatprep.subr.mxu0 0.0
  %722 = vmatpush1.msra.mxu0 0.0
  %723 = vmatprep.subr.mxu0 0.0
  %724 = vmatpush1.msra.mxu0 0.0
  %725 = vmatprep.subr.mxu0 0.0
  %726 = vmatpush1.msra.mxu0 0.0
  %727 = vmatprep.subr.mxu0 0.0
  %728 = vmatpush1.msra.mxu0 0.0
  %729 = vmatprep.subr.mxu0 0.0
  %730 = vmatpush1.msra.mxu0 0.0
  %731 = vmatprep.subr.mxu0 0.0
  %732 = vmatpush1.msra.mxu0 0.0
  %733 = vmatprep.subr.mxu0 0.0
  %734 = vmatpush1.msra.mxu0 0.0
  %735 = vmatprep.subr.mxu0 0.0
  %736 = vmatpush1.msra.mxu0 0.0
  %737 = vmatprep.subr.mxu0 0.0
  %738 = vmatpush1.msra.mxu0 0.0
  %739 = vmatprep.subr.mxu0 0.0
  %740 = vmatpush1.msra.mxu0 0.0
  %741 = vmatprep.subr.mxu0 0.0
  %742 = vmatpush1.msra.mxu0 0.0
  %743 = vmatprep.subr.mxu0 0.0
  %744 = vmatpush1.msra.mxu0 0.0
  %745 = vmatprep.subr.mxu0 0.0
  %746 = vmatpush1.msra.mxu0 0.0
  %747 = vmatprep.subr.mxu0 0.0
  %748 = vmatpush1.msra.mxu0 0.0
  %749 = vmatprep.subr.mxu0 0.0
  %750 = vmatpush1.msra.mxu0 0.0
  %751 = vmatprep.subr.mxu0 0.0
  %752 = vmatpush1.msra.mxu0 0.0
  %753 = vmatprep.subr.mxu0 0.0
  %754 = vmatpush1.msra.mxu0 0.0
  %755 = vmatprep.subr.mxu0 0.0
  %756 = vmatpush1.msra.mxu0 0.0
  %757 = vmatprep.subr.mxu0 0.0
  %758 = vmatpush1.msra.mxu0 0.0
  %759 = vmatprep.subr.mxu0 0.0
  %760 = vmatpush1.msra.mxu0 0.0
  %761 = vmatprep.subr.mxu0 0.0
  %762 = vmatpush1.msra.mxu0 0.0
  %763 = vmatprep.subr.mxu0 0.0
  %764 = vmatpush1.msra.mxu0 0.0
  %765 = vmatprep.subr.mxu0 0.0
  %766 = vmatpush1.msra.mxu0 0.0
  %767 = vmatprep.subr.mxu0 0.0
  %768 = vmatpush1.msra.mxu0 0.0
  %769 = vmatprep.mubr.f32.mxu0 0.0
  %770 = vmatmul.mubr.f32.gmra.mrb[0].mxu0 %v703
  %v771 = vpop.f32.mrb[0].mxu0
  %v772 = vadd.f32 %v51, %v771
  %v773 = vpop.f32.mrb[0].mxu0
  %774 = vdwg.mxu0
  %v775 = vtanh.pop %v772
  %777 = vrot.lane.b32.xlu0 %v694, 32
  %v778 = vpop.permute.xlu0 %777
  %v780 = vsel %vm138, %v775, %v778
  %v782 = vsel %vm140, %v780, 0
  %784 = vmatprep.subr.mxu0 0.0
  %785 = vmatpush1.msra.mxu0 %v38
  %786 = vmatprep.subr.mxu0 0.0
  %787 = vmatpush1.msra.mxu0 %v39
  %788 = vmatprep.subr.mxu0 0.0
  %789 = vmatpush1.msra.mxu0 %v40
  %790 = vmatprep.subr.mxu0 0.0
  %791 = vmatpush1.msra.mxu0 %v41
  %792 = vmatprep.subr.mxu0 0.0
  %793 = vmatpush1.msra.mxu0 %v42
  %794 = vmatprep.subr.mxu0 0.0
  %795 = vmatpush1.msra.mxu0 %v43
  %796 = vmatprep.subr.mxu0 0.0
  %797 = vmatpush1.msra.mxu0 %v44
  %798 = vmatprep.subr.mxu0 0.0
  %799 = vmatpush1.msra.mxu0 %v45
  %800 = vmatprep.subr.mxu0 0.0
  %801 = vmatpush1.msra.mxu0 0.0
  %802 = vmatprep.subr.mxu0 0.0
  %803 = vmatpush1.msra.mxu0 0.0
  %804 = vmatprep.subr.mxu0 0.0
  %805 = vmatpush1.msra.mxu0 0.0
  %806 = vmatprep.subr.mxu0 0.0
  %807 = vmatpush1.msra.mxu0 0.0
  %808 = vmatprep.subr.mxu0 0.0
  %809 = vmatpush1.msra.mxu0 0.0
  %810 = vmatprep.subr.mxu0 0.0
  %811 = vmatpush1.msra.mxu0 0.0
  %812 = vmatprep.subr.mxu0 0.0
  %813 = vmatpush1.msra.mxu0 0.0
  %814 = vmatprep.subr.mxu0 0.0
  %815 = vmatpush1.msra.mxu0 0.0
  %816 = vmatprep.subr.mxu0 0.0
  %817 = vmatpush1.msra.mxu0 0.0
  %818 = vmatprep.subr.mxu0 0.0
  %819 = vmatpush1.msra.mxu0 0.0
  %820 = vmatprep.subr.mxu0 0.0
  %821 = vmatpush1.msra.mxu0 0.0
  %822 = vmatprep.subr.mxu0 0.0
  %823 = vmatpush1.msra.mxu0 0.0
  %824 = vmatprep.subr.mxu0 0.0
  %825 = vmatpush1.msra.mxu0 0.0
  %826 = vmatprep.subr.mxu0 0.0
  %827 = vmatpush1.msra.mxu0 0.0
  %828 = vmatprep.subr.mxu0 0.0
  %829 = vmatpush1.msra.mxu0 0.0
  %830 = vmatprep.subr.mxu0 0.0
  %831 = vmatpush1.msra.mxu0 0.0
  %832 = vmatprep.subr.mxu0 0.0
  %833 = vmatpush1.msra.mxu0 0.0
  %834 = vmatprep.subr.mxu0 0.0
  %835 = vmatpush1.msra.mxu0 0.0
  %836 = vmatprep.subr.mxu0 0.0
  %837 = vmatpush1.msra.mxu0 0.0
  %838 = vmatprep.subr.mxu0 0.0
  %839 = vmatpush1.msra.mxu0 0.0
  %840 = vmatprep.subr.mxu0 0.0
  %841 = vmatpush1.msra.mxu0 0.0
  %842 = vmatprep.subr.mxu0 0.0
  %843 = vmatpush1.msra.mxu0 0.0
  %844 = vmatprep.subr.mxu0 0.0
  %845 = vmatpush1.msra.mxu0 0.0
  %846 = vmatprep.subr.mxu0 0.0
  %847 = vmatpush1.msra.mxu0 0.0
  %848 = vmatprep.mubr.f32.mxu0 0.0
  %849 = vmatmul.mubr.f32.gmra.mrb[0].mxu0 %v782
  %v850 = vpop.f32.mrb[0].mxu0
  %v851 = vadd.f32 %v58, %v850
  %v852 = vpop.f32.mrb[0].mxu0
  %853 = vdwg.mxu0
  %v854 = vtanh.pop %v851
  %s855 = scalar_lea.vmem %s0, 40
  %v856 = vld [vmem:[%s855] sm:$0xff]
  %858 = vrot.lane.b32.xlu0 %v775, 16
  %v859 = vpop.permute.xlu0 %858
  %v861 = vsel %vm61, %v856, %v859
  %v863 = vsel %vm63, %v861, 0
  %865 = vmatprep.subr.mxu0 0.0
  %866 = vmatpush1.msra.mxu0 %v32
  %867 = vmatprep.subr.mxu0 0.0
  %868 = vmatpush1.msra.mxu0 %v33
  %869 = vmatprep.subr.mxu0 0.0
  %870 = vmatpush1.msra.mxu0 %v34
  %871 = vmatprep.subr.mxu0 0.0
  %872 = vmatpush1.msra.mxu0 %v35
  %873 = vmatprep.subr.mxu0 0.0
  %874 = vmatpush1.msra.mxu0 %v36
  %875 = vmatprep.subr.mxu0 0.0
  %876 = vmatpush1.msra.mxu0 %v37
  %877 = vmatprep.subr.mxu0 0.0
  %878 = vmatpush1.msra.mxu0 0.0
  %879 = vmatprep.subr.mxu0 0.0
  %880 = vmatpush1.msra.mxu0 0.0
  %881 = vmatprep.subr.mxu0 0.0
  %882 = vmatpush1.msra.mxu0 0.0
  %883 = vmatprep.subr.mxu0 0.0
  %884 = vmatpush1.msra.mxu0 0.0
  %885 = vmatprep.subr.mxu0 0.0
  %886 = vmatpush1.msra.mxu0 0.0
  %887 = vmatprep.subr.mxu0 0.0
  %888 = vmatpush1.msra.mxu0 0.0
  %889 = vmatprep.subr.mxu0 0.0
  %890 = vmatpush1.msra.mxu0 0.0
  %891 = vmatprep.subr.mxu0 0.0
  %892 = vmatpush1.msra.mxu0 0.0
  %893 = vmatprep.subr.mxu0 0.0
  %894 = vmatpush1.msra.mxu0 0.0
  %895 = vmatprep.subr.mxu0 0.0
  %896 = vmatpush1.msra.mxu0 0.0
  %897 = vmatprep.subr.mxu0 0.0
  %898 = vmatpush1.msra.mxu0 0.0
  %899 = vmatprep.subr.mxu0 0.0
  %900 = vmatpush1.msra.mxu0 0.0
  %901 = vmatprep.subr.mxu0 0.0
  %902 = vmatpush1.msra.mxu0 0.0
  %903 = vmatprep.subr.mxu0 0.0
  %904 = vmatpush1.msra.mxu0 0.0
  %905 = vmatprep.subr.mxu0 0.0
  %906 = vmatpush1.msra.mxu0 0.0
  %907 = vmatprep.subr.mxu0 0.0
  %908 = vmatpush1.msra.mxu0 0.0
  %909 = vmatprep.subr.mxu0 0.0
  %910 = vmatpush1.msra.mxu0 0.0
  %911 = vmatprep.subr.mxu0 0.0
  %912 = vmatpush1.msra.mxu0 0.0
  %913 = vmatprep.subr.mxu0 0.0
  %914 = vmatpush1.msra.mxu0 0.0
  %915 = vmatprep.subr.mxu0 0.0
  %916 = vmatpush1.msra.mxu0 0.0
  %917 = vmatprep.subr.mxu0 0.0
  %918 = vmatpush1.msra.mxu0 0.0
  %919 = vmatprep.subr.mxu0 0.0
  %920 = vmatpush1.msra.mxu0 0.0
  %921 = vmatprep.subr.mxu0 0.0
  %922 = vmatpush1.msra.mxu0 0.0
  %923 = vmatprep.subr.mxu0 0.0
  %924 = vmatpush1.msra.mxu0 0.0
  %925 = vmatprep.subr.mxu0 0.0
  %926 = vmatpush1.msra.mxu0 0.0
  %927 = vmatprep.subr.mxu0 0.0
  %928 = vmatpush1.msra.mxu0 0.0
  %929 = vmatprep.mubr.f32.mxu0 0.0
  %930 = vmatmul.mubr.f32.gmra.mrb[0].mxu0 %v863
  %v931 = vpop.f32.mrb[0].mxu0
  %v932 = vadd.f32 %v51, %v931
  %v933 = vpop.f32.mrb[0].mxu0
  %934 = vdwg.mxu0
  %v935 = vtanh.pop %v932
  %937 = vrot.lane.b32.xlu0 %v854, 32
  %v938 = vpop.permute.xlu0 %937
  %v940 = vsel %vm138, %v935, %v938
  %v942 = vsel %vm140, %v940, 0
  %944 = vmatprep.subr.mxu0 0.0
  %945 = vmatpush1.msra.mxu0 %v38
  %946 = vmatprep.subr.mxu0 0.0
  %947 = vmatpush1.msra.mxu0 %v39
  %948 = vmatprep.subr.mxu0 0.0
  %949 = vmatpush1.msra.mxu0 %v40
  %950 = vmatprep.subr.mxu0 0.0
  %951 = vmatpush1.msra.mxu0 %v41
  %952 = vmatprep.subr.mxu0 0.0
  %953 = vmatpush1.msra.mxu0 %v42
  %954 = vmatprep.subr.mxu0 0.0
  %955 = vmatpush1.msra.mxu0 %v43
  %956 = vmatprep.subr.mxu0 0.0
  %957 = vmatpush1.msra.mxu0 %v44
  %958 = vmatprep.subr.mxu0 0.0
  %959 = vmatpush1.msra.mxu0 %v45
  %960 = vmatprep.subr.mxu0 0.0
  %961 = vmatpush1.msra.mxu0 0.0
  %962 = vmatprep.subr.mxu0 0.0
  %963 = vmatpush1.msra.mxu0 0.0
  %964 = vmatprep.subr.mxu0 0.0
  %965 = vmatpush1.msra.mxu0 0.0
  %966 = vmatprep.subr.mxu0 0.0
  %967 = vmatpush1.msra.mxu0 0.0
  %968 = vmatprep.subr.mxu0 0.0
  %969 = vmatpush1.msra.mxu0 0.0
  %970 = vmatprep.subr.mxu0 0.0
  %971 = vmatpush1.msra.mxu0 0.0
  %972 = vmatprep.subr.mxu0 0.0
  %973 = vmatpush1.msra.mxu0 0.0
  %974 = vmatprep.subr.mxu0 0.0
  %975 = vmatpush1.msra.mxu0 0.0
  %976 = vmatprep.subr.mxu0 0.0
  %977 = vmatpush1.msra.mxu0 0.0
  %978 = vmatprep.subr.mxu0 0.0
  %979 = vmatpush1.msra.mxu0 0.0
  %980 = vmatprep.subr.mxu0 0.0
  %981 = vmatpush1.msra.mxu0 0.0
  %982 = vmatprep.subr.mxu0 0.0
  %983 = vmatpush1.msra.mxu0 0.0
  %984 = vmatprep.subr.mxu0 0.0
  %985 = vmatpush1.msra.mxu0 0.0
  %986 = vmatprep.subr.mxu0 0.0
  %987 = vmatpush1.msra.mxu0 0.0
  %988 = vmatprep.subr.mxu0 0.0
  %989 = vmatpush1.msra.mxu0 0.0
  %990 = vmatprep.subr.mxu0 0.0
  %991 = vmatpush1.msra.mxu0 0.0
  %992 = vmatprep.subr.mxu0 0.0
  %993 = vmatpush1.msra.mxu0 0.0
  %994 = vmatprep.subr.mxu0 0.0
  %995 = vmatpush1.msra.mxu0 0.0
  %996 = vmatprep.subr.mxu0 0.0
  %997 = vmatpush1.msra.mxu0 0.0
  %998 = vmatprep.subr.mxu0 0.0
  %999 = vmatpush1.msra.mxu0 0.0
  %1000 = vmatprep.subr.mxu0 0.0
  %1001 = vmatpush1.msra.mxu0 0.0
  %1002 = vmatprep.subr.mxu0 0.0
  %1003 = vmatpush1.msra.mxu0 0.0
  %1004 = vmatprep.subr.mxu0 0.0
  %1005 = vmatpush1.msra.mxu0 0.0
  %1006 = vmatprep.subr.mxu0 0.0
  %1007 = vmatpush1.msra.mxu0 0.0
  %1008 = vmatprep.mubr.f32.mxu0 0.0
  %1009 = vmatmul.mubr.f32.gmra.mrb[0].mxu0 %v942
  %v1010 = vpop.f32.mrb[0].mxu0
  %v1011 = vadd.f32 %v58, %v1010
  %v1012 = vpop.f32.mrb[0].mxu0
  %1013 = vdwg.mxu0
  %v1014 = vtanh.pop %v1011
  %s1015 = scalar_lea.vmem %s0, 48
  %v1016 = vld [vmem:[%s1015] sm:$0xff]
  %1018 = vrot.lane.b32.xlu0 %v935, 16
  %v1019 = vpop.permute.xlu0 %1018
  %v1021 = vsel %vm61, %v1016, %v1019
  %v1023 = vsel %vm63, %v1021, 0
  %1025 = vmatprep.subr.mxu0 0.0
  %1026 = vmatpush1.msra.mxu0 %v32
  %1027 = vmatprep.subr.mxu0 0.0
  %1028 = vmatpush1.msra.mxu0 %v33
  %1029 = vmatprep.subr.mxu0 0.0
  %1030 = vmatpush1.msra.mxu0 %v34
  %1031 = vmatprep.subr.mxu0 0.0
  %1032 = vmatpush1.msra.mxu0 %v35
  %1033 = vmatprep.subr.mxu0 0.0
  %1034 = vmatpush1.msra.mxu0 %v36
  %1035 = vmatprep.subr.mxu0 0.0
  %1036 = vmatpush1.msra.mxu0 %v37
  %1037 = vmatprep.subr.mxu0 0.0
  %1038 = vmatpush1.msra.mxu0 0.0
  %1039 = vmatprep.subr.mxu0 0.0
  %1040 = vmatpush1.msra.mxu0 0.0
  %1041 = vmatprep.subr.mxu0 0.0
  %1042 = vmatpush1.msra.mxu0 0.0
  %1043 = vmatprep.subr.mxu0 0.0
  %1044 = vmatpush1.msra.mxu0 0.0
  %1045 = vmatprep.subr.mxu0 0.0
  %1046 = vmatpush1.msra.mxu0 0.0
  %1047 = vmatprep.subr.mxu0 0.0
  %1048 = vmatpush1.msra.mxu0 0.0
  %1049 = vmatprep.subr.mxu0 0.0
  %1050 = vmatpush1.msra.mxu0 0.0
  %1051 = vmatprep.subr.mxu0 0.0
  %1052 = vmatpush1.msra.mxu0 0.0
  %1053 = vmatprep.subr.mxu0 0.0
  %1054 = vmatpush1.msra.mxu0 0.0
  %1055 = vmatprep.subr.mxu0 0.0
  %1056 = vmatpush1.msra.mxu0 0.0
  %1057 = vmatprep.subr.mxu0 0.0
  %1058 = vmatpush1.msra.mxu0 0.0
  %1059 = vmatprep.subr.mxu0 0.0
  %1060 = vmatpush1.msra.mxu0 0.0
  %1061 = vmatprep.subr.mxu0 0.0
  %1062 = vmatpush1.msra.mxu0 0.0
  %1063 = vmatprep.subr.mxu0 0.0
  %1064 = vmatpush1.msra.mxu0 0.0
  %1065 = vmatprep.subr.mxu0 0.0
  %1066 = vmatpush1.msra.mxu0 0.0
  %1067 = vmatprep.subr.mxu0 0.0
  %1068 = vmatpush1.msra.mxu0 0.0
  %1069 = vmatprep.subr.mxu0 0.0
  %1070 = vmatpush1.msra.mxu0 0.0
  %1071 = vmatprep.subr.mxu0 0.0
  %1072 = vmatpush1.msra.mxu0 0.0
  %1073 = vmatprep.subr.mxu0 0.0
  %1074 = vmatpush1.msra.mxu0 0.0
  %1075 = vmatprep.subr.mxu0 0.0
  %1076 = vmatpush1.msra.mxu0 0.0
  %1077 = vmatprep.subr.mxu0 0.0
  %1078 = vmatpush1.msra.mxu0 0.0
  %1079 = vmatprep.subr.mxu0 0.0
  %1080 = vmatpush1.msra.mxu0 0.0
  %1081 = vmatprep.subr.mxu0 0.0
  %1082 = vmatpush1.msra.mxu0 0.0
  %1083 = vmatprep.subr.mxu0 0.0
  %1084 = vmatpush1.msra.mxu0 0.0
  %1085 = vmatprep.subr.mxu0 0.0
  %1086 = vmatpush1.msra.mxu0 0.0
  %1087 = vmatprep.subr.mxu0 0.0
  %1088 = vmatpush1.msra.mxu0 0.0
  %1089 = vmatprep.mubr.f32.mxu0 0.0
  %1090 = vmatmul.mubr.f32.gmra.mrb[0].mxu0 %v1023
  %v1091 = vpop.f32.mrb[0].mxu0
  %v1092 = vadd.f32 %v51, %v1091
  %v1093 = vpop.f32.mrb[0].mxu0
  %1094 = vdwg.mxu0
  %v1095 = vtanh.pop %v1092
  %1097 = vrot.lane.b32.xlu0 %v1014, 32
  %v1098 = vpop.permute.xlu0 %1097
  %v1100 = vsel %vm138, %v1095, %v1098
  %v1102 = vsel %vm140, %v1100, 0
  %1104 = vmatprep.subr.mxu0 0.0
  %1105 = vmatpush1.msra.mxu0 %v38
  %1106 = vmatprep.subr.mxu0 0.0
  %1107 = vmatpush1.msra.mxu0 %v39
  %1108 = vmatprep.subr.mxu0 0.0
  %1109 = vmatpush1.msra.mxu0 %v40
  %1110 = vmatprep.subr.mxu0 0.0
  %1111 = vmatpush1.msra.mxu0 %v41
  %1112 = vmatprep.subr.mxu0 0.0
  %1113 = vmatpush1.msra.mxu0 %v42
  %1114 = vmatprep.subr.mxu0 0.0
  %1115 = vmatpush1.msra.mxu0 %v43
  %1116 = vmatprep.subr.mxu0 0.0
  %1117 = vmatpush1.msra.mxu0 %v44
  %1118 = vmatprep.subr.mxu0 0.0
  %1119 = vmatpush1.msra.mxu0 %v45
  %1120 = vmatprep.subr.mxu0 0.0
  %1121 = vmatpush1.msra.mxu0 0.0
  %1122 = vmatprep.subr.mxu0 0.0
  %1123 = vmatpush1.msra.mxu0 0.0
  %1124 = vmatprep.subr.mxu0 0.0
  %1125 = vmatpush1.msra.mxu0 0.0
  %1126 = vmatprep.subr.mxu0 0.0
  %1127 = vmatpush1.msra.mxu0 0.0
  %1128 = vmatprep.subr.mxu0 0.0
  %1129 = vmatpush1.msra.mxu0 0.0
  %1130 = vmatprep.subr.mxu0 0.0
  %1131 = vmatpush1.msra.mxu0 0.0
  %1132 = vmatprep.subr.mxu0 0.0
  %1133 = vmatpush1.msra.mxu0 0.0
  %1134 = vmatprep.subr.mxu0 0.0
  %1135 = vmatpush1.msra.mxu0 0.0
  %1136 = vmatprep.subr.mxu0 0.0
  %1137 = vmatpush1.msra.mxu0 0.0
  %1138 = vmatprep.subr.mxu0 0.0
  %1139 = vmatpush1.msra.mxu0 0.0
  %1140 = vmatprep.subr.mxu0 0.0
  %1141 = vmatpush1.msra.mxu0 0.0
  %1142 = vmatprep.subr.mxu0 0.0
  %1143 = vmatpush1.msra.mxu0 0.0
  %1144 = vmatprep.subr.mxu0 0.0
  %1145 = vmatpush1.msra.mxu0 0.0
  %1146 = vmatprep.subr.mxu0 0.0
  %1147 = vmatpush1.msra.mxu0 0.0
  %1148 = vmatprep.subr.mxu0 0.0
  %1149 = vmatpush1.msra.mxu0 0.0
  %1150 = vmatprep.subr.mxu0 0.0
  %1151 = vmatpush1.msra.mxu0 0.0
  %1152 = vmatprep.subr.mxu0 0.0
  %1153 = vmatpush1.msra.mxu0 0.0
  %1154 = vmatprep.subr.mxu0 0.0
  %1155 = vmatpush1.msra.mxu0 0.0
  %1156 = vmatprep.subr.mxu0 0.0
  %1157 = vmatpush1.msra.mxu0 0.0
  %1158 = vmatprep.subr.mxu0 0.0
  %1159 = vmatpush1.msra.mxu0 0.0
  %1160 = vmatprep.subr.mxu0 0.0
  %1161 = vmatpush1.msra.mxu0 0.0
  %1162 = vmatprep.subr.mxu0 0.0
  %1163 = vmatpush1.msra.mxu0 0.0
  %1164 = vmatprep.subr.mxu0 0.0
  %1165 = vmatpush1.msra.mxu0 0.0
  %1166 = vmatprep.subr.mxu0 0.0
  %1167 = vmatpush1.msra.mxu0 0.0
  %1168 = vmatprep.mubr.f32.mxu0 0.0
  %1169 = vmatmul.mubr.f32.gmra.mrb[0].mxu0 %v1102
  %v1170 = vpop.f32.mrb[0].mxu0
  %v1171 = vadd.f32 %v58, %v1170
  %v1172 = vpop.f32.mrb[0].mxu0
  %1173 = vdwg.mxu0
  %v1174 = vtanh.pop %v1171
  %s1175 = scalar_lea.vmem %s0, 56
  %v1176 = vld [vmem:[%s1175] sm:$0xff]
  %1178 = vrot.lane.b32.xlu0 %v1095, 16
  %v1179 = vpop.permute.xlu0 %1178
  %v1181 = vsel %vm61, %v1176, %v1179
  %v1183 = vsel %vm63, %v1181, 0
  %1185 = vmatprep.subr.mxu0 0.0
  %1186 = vmatpush1.msra.mxu0 %v32
  %1187 = vmatprep.subr.mxu0 0.0
  %1188 = vmatpush1.msra.mxu0 %v33
  %1189 = vmatprep.subr.mxu0 0.0
  %1190 = vmatpush1.msra.mxu0 %v34
  %1191 = vmatprep.subr.mxu0 0.0
  %1192 = vmatpush1.msra.mxu0 %v35
  %1193 = vmatprep.subr.mxu0 0.0
  %1194 = vmatpush1.msra.mxu0 %v36
  %1195 = vmatprep.subr.mxu0 0.0
  %1196 = vmatpush1.msra.mxu0 %v37
  %1197 = vmatprep.subr.mxu0 0.0
  %1198 = vmatpush1.msra.mxu0 0.0
  %1199 = vmatprep.subr.mxu0 0.0
  %1200 = vmatpush1.msra.mxu0 0.0
  %1201 = vmatprep.subr.mxu0 0.0
  %1202 = vmatpush1.msra.mxu0 0.0
  %1203 = vmatprep.subr.mxu0 0.0
  %1204 = vmatpush1.msra.mxu0 0.0
  %1205 = vmatprep.subr.mxu0 0.0
  %1206 = vmatpush1.msra.mxu0 0.0
  %1207 = vmatprep.subr.mxu0 0.0
  %1208 = vmatpush1.msra.mxu0 0.0
  %1209 = vmatprep.subr.mxu0 0.0
  %1210 = vmatpush1.msra.mxu0 0.0
  %1211 = vmatprep.subr.mxu0 0.0
  %1212 = vmatpush1.msra.mxu0 0.0
  %1213 = vmatprep.subr.mxu0 0.0
  %1214 = vmatpush1.msra.mxu0 0.0
  %1215 = vmatprep.subr.mxu0 0.0
  %1216 = vmatpush1.msra.mxu0 0.0
  %1217 = vmatprep.subr.mxu0 0.0
  %1218 = vmatpush1.msra.mxu0 0.0
  %1219 = vmatprep.subr.mxu0 0.0
  %1220 = vmatpush1.msra.mxu0 0.0
  %1221 = vmatprep.subr.mxu0 0.0
  %1222 = vmatpush1.msra.mxu0 0.0
  %1223 = vmatprep.subr.mxu0 0.0
  %1224 = vmatpush1.msra.mxu0 0.0
  %1225 = vmatprep.subr.mxu0 0.0
  %1226 = vmatpush1.msra.mxu0 0.0
  %1227 = vmatprep.subr.mxu0 0.0
  %1228 = vmatpush1.msra.mxu0 0.0
  %1229 = vmatprep.subr.mxu0 0.0
  %1230 = vmatpush1.msra.mxu0 0.0
  %1231 = vmatprep.subr.mxu0 0.0
  %1232 = vmatpush1.msra.mxu0 0.0
  %1233 = vmatprep.subr.mxu0 0.0
  %1234 = vmatpush1.msra.mxu0 0.0
  %1235 = vmatprep.subr.mxu0 0.0
  %1236 = vmatpush1.msra.mxu0 0.0
  %1237 = vmatprep.subr.mxu0 0.0
  %1238 = vmatpush1.msra.mxu0 0.0
  %1239 = vmatprep.subr.mxu0 0.0
  %1240 = vmatpush1.msra.mxu0 0.0
  %1241 = vmatprep.subr.mxu0 0.0
  %1242 = vmatpush1.msra.mxu0 0.0
  %1243 = vmatprep.subr.mxu0 0.0
  %1244 = vmatpush1.msra.mxu0 0.0
  %1245 = vmatprep.subr.mxu0 0.0
  %1246 = vmatpush1.msra.mxu0 0.0
  %1247 = vmatprep.subr.mxu0 0.0
  %1248 = vmatpush1.msra.mxu0 0.0
  %1249 = vmatprep.mubr.f32.mxu0 0.0
  %1250 = vmatmul.mubr.f32.gmra.mrb[0].mxu0 %v1183
  %v1251 = vpop.f32.mrb[0].mxu0
  %v1252 = vadd.f32 %v51, %v1251
  %v1253 = vpop.f32.mrb[0].mxu0
  %1254 = vdwg.mxu0
  %v1255 = vtanh.pop %v1252
  %1257 = vrot.lane.b32.xlu0 %v1174, 32
  %v1258 = vpop.permute.xlu0 %1257
  %v1260 = vsel %vm138, %v1255, %v1258
  %v1262 = vsel %vm140, %v1260, 0
  %1264 = vmatprep.subr.mxu0 0.0
  %1265 = vmatpush1.msra.mxu0 %v38
  %1266 = vmatprep.subr.mxu0 0.0
  %1267 = vmatpush1.msra.mxu0 %v39
  %1268 = vmatprep.subr.mxu0 0.0
  %1269 = vmatpush1.msra.mxu0 %v40
  %1270 = vmatprep.subr.mxu0 0.0
  %1271 = vmatpush1.msra.mxu0 %v41
  %1272 = vmatprep.subr.mxu0 0.0
  %1273 = vmatpush1.msra.mxu0 %v42
  %1274 = vmatprep.subr.mxu0 0.0
  %1275 = vmatpush1.msra.mxu0 %v43
  %1276 = vmatprep.subr.mxu0 0.0
  %1277 = vmatpush1.msra.mxu0 %v44
  %1278 = vmatprep.subr.mxu0 0.0
  %1279 = vmatpush1.msra.mxu0 %v45
  %1280 = vmatprep.subr.mxu0 0.0
  %1281 = vmatpush1.msra.mxu0 0.0
  %1282 = vmatprep.subr.mxu0 0.0
  %1283 = vmatpush1.msra.mxu0 0.0
  %1284 = vmatprep.subr.mxu0 0.0
  %1285 = vmatpush1.msra.mxu0 0.0
  %1286 = vmatprep.subr.mxu0 0.0
  %1287 = vmatpush1.msra.mxu0 0.0
  %1288 = vmatprep.subr.mxu0 0.0
  %1289 = vmatpush1.msra.mxu0 0.0
  %1290 = vmatprep.subr.mxu0 0.0
  %1291 = vmatpush1.msra.mxu0 0.0
  %1292 = vmatprep.subr.mxu0 0.0
  %1293 = vmatpush1.msra.mxu0 0.0
  %1294 = vmatprep.subr.mxu0 0.0
  %1295 = vmatpush1.msra.mxu0 0.0
  %1296 = vmatprep.subr.mxu0 0.0
  %1297 = vmatpush1.msra.mxu0 0.0
  %1298 = vmatprep.subr.mxu0 0.0
  %1299 = vmatpush1.msra.mxu0 0.0
  %1300 = vmatprep.subr.mxu0 0.0
  %1301 = vmatpush1.msra.mxu0 0.0
  %1302 = vmatprep.subr.mxu0 0.0
  %1303 = vmatpush1.msra.mxu0 0.0
  %1304 = vmatprep.subr.mxu0 0.0
  %1305 = vmatpush1.msra.mxu0 0.0
  %1306 = vmatprep.subr.mxu0 0.0
  %1307 = vmatpush1.msra.mxu0 0.0
  %1308 = vmatprep.subr.mxu0 0.0
  %1309 = vmatpush1.msra.mxu0 0.0
  %1310 = vmatprep.subr.mxu0 0.0
  %1311 = vmatpush1.msra.mxu0 0.0
  %1312 = vmatprep.subr.mxu0 0.0
  %1313 = vmatpush1.msra.mxu0 0.0
  %1314 = vmatprep.subr.mxu0 0.0
  %1315 = vmatpush1.msra.mxu0 0.0
  %1316 = vmatprep.subr.mxu0 0.0
  %1317 = vmatpush1.msra.mxu0 0.0
  %1318 = vmatprep.subr.mxu0 0.0
  %1319 = vmatpush1.msra.mxu0 0.0
  %1320 = vmatprep.subr.mxu0 0.0
  %1321 = vmatpush1.msra.mxu0 0.0
  %1322 = vmatprep.subr.mxu0 0.0
  %1323 = vmatpush1.msra.mxu0 0.0
  %1324 = vmatprep.subr.mxu0 0.0
  %1325 = vmatpush1.msra.mxu0 0.0
  %1326 = vmatprep.subr.mxu0 0.0
  %1327 = vmatpush1.msra.mxu0 0.0
  %1328 = vmatprep.mubr.f32.mxu0 0.0
  %1329 = vmatmul.mubr.f32.gmra.mrb[0].mxu0 %v1262
  %v1330 = vpop.f32.mrb[0].mxu0
  %v1331 = vadd.f32 %v58, %v1330
  %v1332 = vpop.f32.mrb[0].mxu0
  %1333 = vdwg.mxu0
  %v1334 = vtanh.pop %v1331
  %v1335 = vld [vmem:[%s5] sm:$0xff]
  %v1336 = vld [vmem:[%s5 + $0x8] sm:$0xff]
  %v1337 = vld [vmem:[%s5 + $0x10] sm:$0xff]
  %v1338 = vld [vmem:[%s5 + $0x18] sm:$0xff]
  %v1339 = vld [vmem:[%s6] sm:$0x1]
  %v1341 = vlaneseq
  %v1342 = vshrl.u32 %v1341, 7
  %v1343 = vsub.s32 0, %v1342
  %v1344 = vrot.slane %v1339, %v1343
  %v1347 = vsel %vm138, %v1334, 0
  %1349 = vmatprep.subr.mxu0 0.0
  %1350 = vmatpush1.msra.mxu0 %v1335
  %1351 = vmatprep.subr.mxu0 0.0
  %1352 = vmatpush1.msra.mxu0 %v1336
  %1353 = vmatprep.subr.mxu0 0.0
  %1354 = vmatpush1.msra.mxu0 %v1337
  %1355 = vmatprep.subr.mxu0 0.0
  %1356 = vmatpush1.msra.mxu0 %v1338
  %1357 = vmatprep.subr.mxu0 0.0
  %1358 = vmatpush1.msra.mxu0 0.0
  %1359 = vmatprep.subr.mxu0 0.0
  %1360 = vmatpush1.msra.mxu0 0.0
  %1361 = vmatprep.subr.mxu0 0.0
  %1362 = vmatpush1.msra.mxu0 0.0
  %1363 = vmatprep.subr.mxu0 0.0
  %1364 = vmatpush1.msra.mxu0 0.0
  %1365 = vmatprep.subr.mxu0 0.0
  %1366 = vmatpush1.msra.mxu0 0.0
  %1367 = vmatprep.subr.mxu0 0.0
  %1368 = vmatpush1.msra.mxu0 0.0
  %1369 = vmatprep.subr.mxu0 0.0
  %1370 = vmatpush1.msra.mxu0 0.0
  %1371 = vmatprep.subr.mxu0 0.0
  %1372 = vmatpush1.msra.mxu0 0.0
  %1373 = vmatprep.subr.mxu0 0.0
  %1374 = vmatpush1.msra.mxu0 0.0
  %1375 = vmatprep.subr.mxu0 0.0
  %1376 = vmatpush1.msra.mxu0 0.0
  %1377 = vmatprep.subr.mxu0 0.0
  %1378 = vmatpush1.msra.mxu0 0.0
  %1379 = vmatprep.subr.mxu0 0.0
  %1380 = vmatpush1.msra.mxu0 0.0
  %1381 = vmatprep.subr.mxu0 0.0
  %1382 = vmatpush1.msra.mxu0 0.0
  %1383 = vmatprep.subr.mxu0 0.0
  %1384 = vmatpush1.msra.mxu0 0.0
  %1385 = vmatprep.subr.mxu0 0.0
  %1386 = vmatpush1.msra.mxu0 0.0
  %1387 = vmatprep.subr.mxu0 0.0
  %1388 = vmatpush1.msra.mxu0 0.0
  %1389 = vmatprep.subr.mxu0 0.0
  %1390 = vmatpush1.msra.mxu0 0.0
  %1391 = vmatprep.subr.mxu0 0.0
  %1392 = vmatpush1.msra.mxu0 0.0
  %1393 = vmatprep.subr.mxu0 0.0
  %1394 = vmatpush1.msra.mxu0 0.0
  %1395 = vmatprep.subr.mxu0 0.0
  %1396 = vmatpush1.msra.mxu0 0.0
  %1397 = vmatprep.subr.mxu0 0.0
  %1398 = vmatpush1.msra.mxu0 0.0
  %1399 = vmatprep.subr.mxu0 0.0
  %1400 = vmatpush1.msra.mxu0 0.0
  %1401 = vmatprep.subr.mxu0 0.0
  %1402 = vmatpush1.msra.mxu0 0.0
  %1403 = vmatprep.subr.mxu0 0.0
  %1404 = vmatpush1.msra.mxu0 0.0
  %1405 = vmatprep.subr.mxu0 0.0
  %1406 = vmatpush1.msra.mxu0 0.0
  %1407 = vmatprep.subr.mxu0 0.0
  %1408 = vmatpush1.msra.mxu0 0.0
  %1409 = vmatprep.subr.mxu0 0.0
  %1410 = vmatpush1.msra.mxu0 0.0
  %1411 = vmatprep.subr.mxu0 0.0
  %1412 = vmatpush1.msra.mxu0 0.0
  %1413 = vmatprep.mubr.f32.mxu0 0.0
  %1414 = vmatmul.mubr.f32.gmra.mrb[0].mxu0 %v1347
  %v1415 = vpop.f32.mrb[0].mxu0
  %v1416 = vadd.f32 %v1344, %v1415
  %v1417 = vpop.f32.mrb[0].mxu0
  %1418 = vdwg.mxu0
  %v1419 = vmax.f32 %v1416, 0.0
  %v1420 = vld [vmem:[%s7] sm:$0xff]
  %v1421 = vld [vmem:[%s7 + $0x8] sm:$0xff]
  %v1422 = vld [vmem:[%s7 + $0x10] sm:$0xff]
  %v1423 = vld [vmem:[%s7 + $0x18] sm:$0xff]
  %v1424 = vld [vmem:[%s8] sm:$0x1]
  %v1426 = vlaneseq
  %v1427 = vshrl.u32 %v1426, 7
  %v1428 = vsub.s32 0, %v1427
  %v1429 = vrot.slane %v1424, %v1428
  %v1432 = vsel %vm138, %v1419, 0
  %1434 = vmatprep.subr.mxu0 0.0
  %1435 = vmatpush1.msra.mxu0 %v1420
  %1436 = vmatprep.subr.mxu0 0.0
  %1437 = vmatpush1.msra.mxu0 %v1421
  %1438 = vmatprep.subr.mxu0 0.0
  %1439 = vmatpush1.msra.mxu0 %v1422
  %1440 = vmatprep.subr.mxu0 0.0
  %1441 = vmatpush1.msra.mxu0 %v1423
  %1442 = vmatprep.subr.mxu0 0.0
  %1443 = vmatpush1.msra.mxu0 0.0
  %1444 = vmatprep.subr.mxu0 0.0
  %1445 = vmatpush1.msra.mxu0 0.0
  %1446 = vmatprep.subr.mxu0 0.0
  %1447 = vmatpush1.msra.mxu0 0.0
  %1448 = vmatprep.subr.mxu0 0.0
  %1449 = vmatpush1.msra.mxu0 0.0
  %1450 = vmatprep.subr.mxu0 0.0
  %1451 = vmatpush1.msra.mxu0 0.0
  %1452 = vmatprep.subr.mxu0 0.0
  %1453 = vmatpush1.msra.mxu0 0.0
  %1454 = vmatprep.subr.mxu0 0.0
  %1455 = vmatpush1.msra.mxu0 0.0
  %1456 = vmatprep.subr.mxu0 0.0
  %1457 = vmatpush1.msra.mxu0 0.0
  %1458 = vmatprep.subr.mxu0 0.0
  %1459 = vmatpush1.msra.mxu0 0.0
  %1460 = vmatprep.subr.mxu0 0.0
  %1461 = vmatpush1.msra.mxu0 0.0
  %1462 = vmatprep.subr.mxu0 0.0
  %1463 = vmatpush1.msra.mxu0 0.0
  %1464 = vmatprep.subr.mxu0 0.0
  %1465 = vmatpush1.msra.mxu0 0.0
  %1466 = vmatprep.subr.mxu0 0.0
  %1467 = vmatpush1.msra.mxu0 0.0
  %1468 = vmatprep.subr.mxu0 0.0
  %1469 = vmatpush1.msra.mxu0 0.0
  %1470 = vmatprep.subr.mxu0 0.0
  %1471 = vmatpush1.msra.mxu0 0.0
  %1472 = vmatprep.subr.mxu0 0.0
  %1473 = vmatpush1.msra.mxu0 0.0
  %1474 = vmatprep.subr.mxu0 0.0
  %1475 = vmatpush1.msra.mxu0 0.0
  %1476 = vmatprep.subr.mxu0 0.0
  %1477 = vmatpush1.msra.mxu0 0.0
  %1478 = vmatprep.subr.mxu0 0.0
  %1479 = vmatpush1.msra.mxu0 0.0
  %1480 = vmatprep.subr.mxu0 0.0
  %1481 = vmatpush1.msra.mxu0 0.0
  %1482 = vmatprep.subr.mxu0 0.0
  %1483 = vmatpush1.msra.mxu0 0.0
  %1484 = vmatprep.subr.mxu0 0.0
  %1485 = vmatpush1.msra.mxu0 0.0
  %1486 = vmatprep.subr.mxu0 0.0
  %1487 = vmatpush1.msra.mxu0 0.0
  %1488 = vmatprep.subr.mxu0 0.0
  %1489 = vmatpush1.msra.mxu0 0.0
  %1490 = vmatprep.subr.mxu0 0.0
  %1491 = vmatpush1.msra.mxu0 0.0
  %1492 = vmatprep.subr.mxu0 0.0
  %1493 = vmatpush1.msra.mxu0 0.0
  %1494 = vmatprep.subr.mxu0 0.0
  %1495 = vmatpush1.msra.mxu0 0.0
  %1496 = vmatprep.subr.mxu0 0.0
  %1497 = vmatpush1.msra.mxu0 0.0
  %1498 = vmatprep.mubr.f32.mxu0 0.0
  %1499 = vmatmul.mubr.f32.gmra.mrb[0].mxu0 %v1432
  %v1500 = vpop.f32.mrb[0].mxu0
  %v1501 = vadd.f32 %v1429, %v1500
  %v1502 = vpop.f32.mrb[0].mxu0
  %1503 = vdwg.mxu0
  %vm1504 = vcmask 31744
  %1505 = vst.msk [vmem:[%s9] sm:$0xff] %vm1504, %v1501
  // Predicated region
  $region38: #{_forward_impl.1} parent=0 // pred_check
    _
  $region39: #{_forward_impl.1} parent=0 // pred_check_branch
    %1507 = sbr.rel (0) target = $region41
  $region40: #{_forward_impl.1} parent=0 // pred_region
    _
  $region41: #{_forward_impl.1} parent=0 // pred_fallthru
    _
  // Predicated region
  $region42: #{_forward_impl.1} parent=0 // pred_check
    _
  $region43: #{_forward_impl.1} parent=0 // pred_check_branch
    %1509 = sbr.rel (0) target = $region45
  $region44: #{_forward_impl.1} parent=0 // pred_region
    _
  $region45: #{_forward_impl.1} parent=0 // pred_fallthru
    _

</llo_original>
